<compile_context>
chip_gen: v5e
topology: v5e:2x2
jax: 0.10.0
libtpu: 0.0.40
codegen_flags: <defaults>
</compile_context>

<pallas_src>
import functools
import math

import jax
import jax.numpy as jnp
from jax.experimental import pallas as pl
from jax.experimental.pallas import tpu as pltpu


def qres_kernel(x_ref, w1_ref, w2_ref, b_ref, o_ref, acc1_ref, acc2_ref):
    """Computes one (tm, tn) output tile; grid axis 2 walks the K reduction."""
    k = pl.program_id(2)

    @pl.when(k == 0)
    def _init():
        acc1_ref[...] = jnp.zeros_like(acc1_ref)
        acc2_ref[...] = jnp.zeros_like(acc2_ref)

    # x tile is loaded once and feeds both MXU streams.
    x = x_ref[...]
    acc1_ref[...] += jnp.dot(x, w1_ref[...], preferred_element_type=jnp.float32)
    acc2_ref[...] += jnp.dot(x, w2_ref[...], preferred_element_type=jnp.float32)

    @pl.when(k == pl.num_programs(2) - 1)
    def _epilogue():
        h1 = acc1_ref[...]
        h2 = acc2_ref[...]
        b = b_ref[...].astype(jnp.float32)          # (1, tn), broadcast over rows
        o_ref[...] = (h1 * h2 + h1 + b).astype(o_ref.dtype)


def _pick_tile(dim: int, pref: int, align: int) -> int:
    """Largest tile <= pref that is a multiple of `align` and divides `dim`;
    falls back to the full dim (always a legal block) if none exists."""
    if dim <= pref:
        return dim
    t = (min(pref, dim) // align) * align
    while t >= align:
        if dim % t == 0:
            return t
        t -= align
    return dim


def prepare_params(weight_1, weight_2, bias, compute_dtype=jnp.bfloat16):
    """One-time parameter prep, hoisted OUT of the per-call hot path:
    pre-transpose weights to (in_features, out_features) and cast to the MXU
    compute dtype; bias stays f32 for the epilogue."""
    w1_t = jnp.asarray(weight_1, dtype=compute_dtype).T
    w2_t = jnp.asarray(weight_2, dtype=compute_dtype).T
    b2d = jnp.asarray(bias, dtype=jnp.float32).reshape(1, -1)
    return w1_t, w2_t, b2d


@functools.partial(jax.jit, static_argnames=("out_dtype", "tm", "tn", "tk"))
def qres_forward(x, w1_t, w2_t, b2d, *, out_dtype=None, tm=256, tn=512, tk=512):
    """x: (B, Fin); w*_t: (Fin, Fout) pre-transposed; b2d: (1, Fout) f32."""
    B, Fin = x.shape
    Fin_w, Fout = w1_t.shape
    assert Fin == Fin_w, "weight/input feature mismatch"
    out_dtype = x.dtype if out_dtype is None else out_dtype

    compute_dtype = w1_t.dtype
    x = x.astype(compute_dtype)

    # Pad the batch up to a sublane multiple so the M block shape is legal.
    B_pad = max(8, -(-B // 8) * 8)
    if B_pad != B:
        x = jnp.pad(x, ((0, B_pad - B), (0, 0)))

    tm = _pick_tile(B_pad, tm, 8)     # M: sublane-aligned (small batch -> full B)
    tn = _pick_tile(Fout, tn, 128)    # N: lane-dense output tiles
    tk = _pick_tile(Fin, tk, 128)     # K: reduction tiles

    grid = (B_pad // tm, Fout // tn, Fin // tk)

    in_itemsize = jnp.dtype(compute_dtype).itemsize
    cost = pl.CostEstimate(
        flops=4 * B_pad * Fin * Fout,                 # two GEMMs: 2 * (2*M*N*K)
        transcendentals=0,
        bytes_accessed=(B_pad * Fin * in_itemsize          # x
                        + 2 * Fin * Fout * in_itemsize     # both weights
                        + Fout * 4                         # bias
                        + B_pad * Fout * jnp.dtype(out_dtype).itemsize),  # out
    )

    out = pl.pallas_call(
        qres_kernel,
        out_shape=jax.ShapeDtypeStruct((B_pad, Fout), out_dtype),
        grid=grid,
        in_specs=[
            pl.BlockSpec((tm, tk), lambda i, j, k: (i, k)),   # x (shared by both GEMMs)
            pl.BlockSpec((tk, tn), lambda i, j, k: (k, j)),   # W1^T tile
            pl.BlockSpec((tk, tn), lambda i, j, k: (k, j)),   # W2^T tile
            pl.BlockSpec((1, tn), lambda i, j, k: (0, j)),    # bias tile
        ],
        out_specs=pl.BlockSpec((tm, tn), lambda i, j, k: (i, j)),
        scratch_shapes=[
            pltpu.VMEM((tm, tn), jnp.float32),   # h1 accumulator
            pltpu.VMEM((tm, tn), jnp.float32),   # h2 accumulator
        ],
        compiler_params=pltpu.CompilerParams(
            dimension_semantics=("parallel", "parallel", "arbitrary")),
        cost_estimate=cost,
    )(x, w1_t, w2_t, b2d)

    return out[:B] if B_pad != B else out


def init_params(key, in_features, out_features, dtype=jnp.float32):
    """Mimics PyTorch reset_parameters(): kaiming_uniform_(a=sqrt(5)) reduces
    to uniform(-1/sqrt(fan_in), 1/sqrt(fan_in)); bias uses the same bound."""
    k1, k2, k3 = jax.random.split(key, 3)
    bound = 1.0 / math.sqrt(in_features)
    w1 = jax.random.uniform(k1, (out_features, in_features), dtype,
                            minval=-bound, maxval=bound)
    w2 = jax.random.uniform(k2, (out_features, in_features), dtype,
                            minval=-bound, maxval=bound)
    b = jax.random.uniform(k3, (out_features,), dtype,
                           minval=-bound, maxval=bound)
    return w1, w2, b


if __name__ == "__main__":
    key = jax.random.PRNGKey(0)
    kx, kp = jax.random.split(key)

    batch, in_features, out_features = 8, 1024, 1024
    x = jax.random.normal(kx, (batch, in_features), jnp.float32)
    w1, w2, b = init_params(kp, in_features, out_features)

    # One-time prep (transpose + bf16 cast) — not paid on every forward.
    w1_t, w2_t, b2d = prepare_params(w1, w2, b, compute_dtype=jnp.bfloat16)

    out = qres_forward(x, w1_t, w2_t, b2d, out_dtype=jnp.float32)
    out = jax.block_until_ready(out)
    assert out.shape == (batch, out_features)

    # Reference 1: identical math (bf16 operands, f32 accumulation) — tight check.
    xb = x.astype(jnp.bfloat16)
    h1 = jnp.dot(xb, w1_t, preferred_element_type=jnp.float32)
    h2 = jnp.dot(xb, w2_t, preferred_element_type=jnp.float32)
    ref_bf16 = h1 * h2 + (h1 + b.astype(jnp.float32))
    assert jnp.allclose(out, ref_bf16, atol=5e-3, rtol=5e-3), "mismatch vs bf16 reference"

    # Reference 2: the original f32 PyTorch forward — loose semantic check
    # (difference comes only from bf16 rounding of the operands).
    h1f = jnp.dot(x, w1.T, precision=jax.lax.Precision.HIGHEST)
    h2f = jnp.dot(x, w2.T, precision=jax.lax.Precision.HIGHEST)
    ref_f32 = h1f * h2f + (h1f + b)
    rel_err = jnp.max(jnp.abs(out - ref_f32)) / jnp.max(jnp.abs(ref_f32))
    assert rel_err < 0.05, f"semantic drift vs f32 reference: {rel_err}"

    print("KERNEL_OK")
</pallas_src>

<mosaic_0001>
module attributes {stable_mosaic.version = 11 : i64} {
  func.func @qres_kernel(%arg0: i32, %arg1: i32, %arg2: i32, %arg3: memref<8x512xbf16, #tpu.memory_space<vmem>>, %arg4: memref<512x512xbf16, #tpu.memory_space<vmem>>, %arg5: memref<512x512xbf16, #tpu.memory_space<vmem>>, %arg6: memref<1x512xf32, #tpu.memory_space<vmem>>, %arg7: memref<8x512xf32, #tpu.memory_space<vmem>>, %arg8: memref<8x512xf32, #tpu.memory_space<vmem>>, %arg9: memref<8x512xf32, #tpu.memory_space<vmem>>) attributes {dimension_semantics = [#tpu.dimension_semantics<parallel>, #tpu.dimension_semantics<parallel>, #tpu.dimension_semantics<arbitrary>], iteration_bounds = array<i64: 1, 2, 2>, scalar_prefetch = 0 : i64, scratch_operands = 2 : i64, tpu.core_type = #tpu.core_type<tc>, window_params = [{transform_indices = @transform_0, window_bounds = array<i64: 8, 512>}, {transform_indices = @transform_1, window_bounds = array<i64: 512, 512>}, {transform_indices = @transform_2, window_bounds = array<i64: 512, 512>}, {transform_indices = @transform_3, window_bounds = array<i64: 1, 512>}, {transform_indices = @transform_4, window_bounds = array<i64: 8, 512>}]} {
    %c0_i32 = arith.constant 0 : i32
    %0 = arith.cmpi eq, %arg2, %c0_i32 : i32
    %1 = arith.extui %0 : i1 to i32
    %c0_i32_0 = arith.constant 0 : i32
    %2 = arith.cmpi ne, %1, %c0_i32_0 : i32
    scf.if %2 {
      %cst_16 = arith.constant 0.000000e+00 : f32
      %17 = vector.broadcast %cst_16 : f32 to vector<8x512xf32>
      %c0_17 = arith.constant 0 : index
      %c0_18 = arith.constant 0 : index
      %18 = vector.load %arg8[%c0_17, %c0_18] : memref<8x512xf32, #tpu.memory_space<vmem>>, vector<8x512xf32>
      tpu.vector_store %arg8[%c0_17, %c0_18], %17 {strides = array<i32>} : memref<8x512xf32, #tpu.memory_space<vmem>>, vector<8x512xf32>,
      %cst_19 = arith.constant 0.000000e+00 : f32
      %19 = vector.broadcast %cst_19 : f32 to vector<8x512xf32>
      %c0_20 = arith.constant 0 : index
      %c0_21 = arith.constant 0 : index
      %20 = vector.load %arg9[%c0_20, %c0_21] : memref<8x512xf32, #tpu.memory_space<vmem>>, vector<8x512xf32>
      tpu.vector_store %arg9[%c0_20, %c0_21], %19 {strides = array<i32>} : memref<8x512xf32, #tpu.memory_space<vmem>>, vector<8x512xf32>,
    } else {
    }
    %c0 = arith.constant 0 : index
    %c0_1 = arith.constant 0 : index
    %3 = vector.load %arg3[%c0, %c0_1] : memref<8x512xbf16, #tpu.memory_space<vmem>>, vector<8x512xbf16>
    %c0_2 = arith.constant 0 : index
    %c0_3 = arith.constant 0 : index
    %4 = vector.load %arg8[%c0_2, %c0_3] : memref<8x512xf32, #tpu.memory_space<vmem>>, vector<8x512xf32>
    %c0_4 = arith.constant 0 : index
    %c0_5 = arith.constant 0 : index
    %5 = vector.load %arg4[%c0_4, %c0_5] : memref<512x512xbf16, #tpu.memory_space<vmem>>, vector<512x512xbf16>
    %cst = arith.constant dense<0.000000e+00> : vector<8x512xf32>
    %6 = tpu.matmul %3, %5, %cst {dimension_numbers = #tpu.dot_dimension_numbers<[1], [0], [0], [1], [0, 0, 1, 1], [], []>} : vector<8x512xbf16>, vector<512x512xbf16>, vector<8x512xf32> -> vector<8x512xf32>
    %7 = arith.addf %4, %6 : vector<8x512xf32>
    %c0_6 = arith.constant 0 : index
    %c0_7 = arith.constant 0 : index
    %8 = vector.load %arg8[%c0_6, %c0_7] : memref<8x512xf32, #tpu.memory_space<vmem>>, vector<8x512xf32>
    tpu.vector_store %arg8[%c0_6, %c0_7], %7 {strides = array<i32>} : memref<8x512xf32, #tpu.memory_space<vmem>>, vector<8x512xf32>,
    %c0_8 = arith.constant 0 : index
    %c0_9 = arith.constant 0 : index
    %9 = vector.load %arg9[%c0_8, %c0_9] : memref<8x512xf32, #tpu.memory_space<vmem>>, vector<8x512xf32>
    %c0_10 = arith.constant 0 : index
    %c0_11 = arith.constant 0 : index
    %10 = vector.load %arg5[%c0_10, %c0_11] : memref<512x512xbf16, #tpu.memory_space<vmem>>, vector<512x512xbf16>
    %cst_12 = arith.constant dense<0.000000e+00> : vector<8x512xf32>
    %11 = tpu.matmul %3, %10, %cst_12 {dimension_numbers = #tpu.dot_dimension_numbers<[1], [0], [0], [1], [0, 0, 1, 1], [], []>} : vector<8x512xbf16>, vector<512x512xbf16>, vector<8x512xf32> -> vector<8x512xf32>
    %12 = arith.addf %9, %11 : vector<8x512xf32>
    %c0_13 = arith.constant 0 : index
    %c0_14 = arith.constant 0 : index
    %13 = vector.load %arg9[%c0_13, %c0_14] : memref<8x512xf32, #tpu.memory_space<vmem>>, vector<8x512xf32>
    tpu.vector_store %arg9[%c0_13, %c0_14], %12 {strides = array<i32>} : memref<8x512xf32, #tpu.memory_space<vmem>>, vector<8x512xf32>,
    %c1_i32 = arith.constant 1 : i32
    %14 = arith.cmpi eq, %arg2, %c1_i32 : i32
    %15 = arith.extui %14 : i1 to i32
    %c0_i32_15 = arith.constant 0 : i32
    %16 = arith.cmpi ne, %15, %c0_i32_15 : i32
    scf.if %16 {
      %c0_16 = arith.constant 0 : index
      %c0_17 = arith.constant 0 : index
      %17 = vector.load %arg8[%c0_16, %c0_17] : memref<8x512xf32, #tpu.memory_space<vmem>>, vector<8x512xf32>
      %c0_18 = arith.constant 0 : index
      %c0_19 = arith.constant 0 : index
      %18 = vector.load %arg9[%c0_18, %c0_19] : memref<8x512xf32, #tpu.memory_space<vmem>>, vector<8x512xf32>
      %c0_20 = arith.constant 0 : index
      %c0_21 = arith.constant 0 : index
      %19 = vector.load %arg6[%c0_20, %c0_21] : memref<1x512xf32, #tpu.memory_space<vmem>>, vector<1x512xf32>
      %20 = arith.mulf %17, %18 : vector<8x512xf32>
      %21 = arith.addf %20, %17 : vector<8x512xf32>
      %22 = vector.broadcast %19 : vector<1x512xf32> to vector<8x512xf32>
      %23 = arith.addf %21, %22 : vector<8x512xf32>
      %c0_22 = arith.constant 0 : index
      %c0_23 = arith.constant 0 : index
      %24 = vector.load %arg7[%c0_22, %c0_23] : memref<8x512xf32, #tpu.memory_space<vmem>>, vector<8x512xf32>
      tpu.vector_store %arg7[%c0_22, %c0_23], %23 {strides = array<i32>} : memref<8x512xf32, #tpu.memory_space<vmem>>, vector<8x512xf32>,
    } else {
    }
    return
  }
  func.func @transform_0(%arg0: i32, %arg1: i32, %arg2: i32) -> (i32, i32) {
    %c0_i32 = arith.constant 0 : i32
    return %arg0, %arg2 : i32, i32
  }
  func.func @transform_1(%arg0: i32, %arg1: i32, %arg2: i32) -> (i32, i32) {
    %c0_i32 = arith.constant 0 : i32
    return %arg2, %arg1 : i32, i32
  }
  func.func @transform_2(%arg0: i32, %arg1: i32, %arg2: i32) -> (i32, i32) {
    %c0_i32 = arith.constant 0 : i32
    return %arg2, %arg1 : i32, i32
  }
  func.func @transform_3(%arg0: i32, %arg1: i32, %arg2: i32) -> (i32, i32) {
    %c0_i32 = arith.constant 0 : i32
    %c0_i32_0 = arith.constant 0 : i32
    return %c0_i32, %arg1 : i32, i32
  }
  func.func @transform_4(%arg0: i32, %arg1: i32, %arg2: i32) -> (i32, i32) {
    %c0_i32 = arith.constant 0 : i32
    return %arg0, %arg1 : i32, i32
  }
}

</mosaic_0001>

<llo_original>
// kernel: qres_forward.1
$region0: #{qres_forward.1}
  #allocation0 [shape = 'u32[]', space=smem, size = 0x4, offset = 0x4, fixed_abs, tag = 'smem constant byte address 0x4 - core index']
  #allocation1 [shape = 'u32[72,128]{1,0:T(1,128)}', space=vmem, size = 0x9000, scoped, tag = 'internal scratch']
  #allocation2 [shape = 'f32[8,512]{1,0:T(8,128)}', space=vmem, size = 0x4000, scoped, tag = 'scratch operand']
  #allocation3 [shape = 'f32[8,512]{1,0:T(8,128)}', space=vmem, size = 0x4000, scoped, tag = 'scratch operand']
  %s0 = inlined_call_operand.vmem [shape: bf16[8,1024], index: 0, kind: input, shape index: {}]
  %s1 = inlined_call_operand.hbm [shape: bf16[1024,1024], index: 1, kind: input, shape index: {}]
  %s2 = inlined_call_operand.hbm [shape: bf16[1024,1024], index: 2, kind: input, shape index: {}]
  %s3 = inlined_call_operand.hbm [shape: f32[1,1024], index: 3, kind: input, shape index: {}]
  %s4 = inlined_call_operand.hbm [shape: f32[8,1024], index: 4, kind: output, shape index: {}]
  %s5 = sld [smem:[#allocation0]]
  $region69: #{qres_forward.1} parent=0
    _
  %s7 = ssub.s32 1, %s5
  %s8 = scalar_select 0, %s7, %s5
  $region1: #{qres_forward.1} parent=0
    #allocation4 [shape = 'u8[1048576]{0}', space=vmem, size = 0x100000, scoped, tag = 'input window, operand 1']
    #allocation5 [shape = 's32[2]{0}', space=sflag, size = 0x8, scoped, tag = 'scoped memory for qres_forward.1']
    #allocation6 [shape = 's32[2]{0}', space=sflag, size = 0x8, scoped, tag = 'scoped memory for qres_forward.1']
    #allocation7 [shape = 'u8[1048576]{0}', space=vmem, size = 0x100000, scoped, tag = 'input window, operand 2']
    #allocation8 [shape = 's32[2]{0}', space=sflag, size = 0x8, scoped, tag = 'scoped memory for qres_forward.1']
    #allocation9 [shape = 'u8[4096]{0}', space=vmem, size = 0x1000, scoped, tag = 'input window, operand 3']
    #allocation10 [shape = 'u8[32768]{0}', space=vmem, size = 0x8000, scoped, tag = 'output window, operand 0']
    %9 = vsyncpa [#allocation5], 0
    %s10 = scalar_lea.sflag [#allocation5], 1
    %11 = vsyncpa %s10, 0
    %12 = vsyncpa [#allocation8], 0
    %s13 = scalar_lea.sflag [#allocation8], 1
    %14 = vsyncpa %s13, 0
    %15 = vsyncpa [#allocation6], 0
    %s16 = scalar_lea.sflag [#allocation6], 1
    %17 = vsyncpa %s16, 0
    loop: start=0, step=1, limit=6
    $region2: #{qres_forward.1} parent=1 // loop_pre_header
      _
    $region3: #{qres_forward.1} parent=1 // loop_header
      %s19 = sphi 0, %s23
      %p20 = scmp.ge.s32.totalorder %s19, 6
      %s26 = sphi 0, %s45
      %s27 = sphi 0, %s41
      %s28 = sphi 0, %s37
      %s29 = sphi 0, %s26
      %s30 = sphi 0, %s27
      %s31 = sphi 0, %s28
      %s32 = sphi 0, %s29
      %s33 = sphi 0, %s30
      %s34 = sphi 0, %s31
      %s50 = sphi 0, %s52
      %s53 = sphi 0, %s50
      %s54 = sphi 0, %s53
      %s70 = sphi 0, %s54
      %s78 = sphi 0, %s80
      %s81 = sphi 0, %s78
      %s82 = sphi 0, %s81
      %s98 = sphi 0, %s82
      %s106 = sphi 0, %s108
      %s109 = sphi 0, %s106
      %s110 = sphi 0, %s109
      %s126 = sphi 0, %s110
      %s132 = sphi 0, %s134
      %s135 = sphi 0, %s132
      %s136 = sphi 0, %s135
      %s152 = sphi 0, %s136
      %s160 = sphi 0, %s162
      %s163 = sphi 0, %s160
      %s164 = sphi 0, %s163
      %s180 = sphi 0, %s164
    $region4: #{qres_forward.1} parent=1 // loop_header_branch
      %22 = sbr.rel (%p20) target = $region8
    $region5: #{qres_forward.1} parent=1 // loop_body
      %s24 = ssub.s32 %s19, 1
      %s25 = ssub.s32 %s19, 2
      %s35 = sadd.s32 1, %s28
      %p36 = scmp.ge.s32.totalorder %s35, 2
      %s37 = scalar_select %p36, 0, %s35
      %s38 = sadd.s32 1, %s27
      %s39 = scalar_select %p36, %s38, %s27
      %p40 = scmp.ge.s32.totalorder %s39, 2
      %s41 = scalar_select %p40, 0, %s39
      %s42 = sadd.s32 1, %s26
      %s43 = scalar_select %p40, %s42, %s26
      %p44 = scmp.ge.s32.totalorder %s43, 1
      %s45 = scalar_select %p44, 0, %s43
      %s46 = ssub.s32 %s26, %s45
      %s47 = ssub.s32 %s28, %s37
      %s48 = sor.u32 %s46, %s47
      %p49 = scmp.eq.s32.totalorder %s48, 0
      %s51 = sadd.s32 %s50, 1
      %s52 = scalar_select %p49, %s50, %s51
      %p55 = pneg %p49
      %p56 = scmp.eq.s32.totalorder %s19, 3
      %p57 = por %p55, %p56
      %p58 = scmp.ne.s32.totalorder %s50, %s53
      %p59 = scmp.eq.s32.totalorder %s19, 0
      %p60 = por %p58, %p59
      %p61 = scmp.ne.s32.totalorder %s50, %s53
      %p62 = scmp.eq.s32.totalorder %s24, 3
      %p63 = por %p61, %p62
      %p64 = scmp.ne.s32.totalorder %s53, %s54
      %p65 = scmp.eq.s32.totalorder %s24, 0
      %p66 = por %p64, %p65
      %p67 = scmp.ne.s32.totalorder %s53, %s54
      %p68 = scmp.eq.s32.totalorder %s25, 3
      %p69 = por %p67, %p68
      %p71 = scmp.ne.s32.totalorder %s54, %s70
      %p72 = scmp.eq.s32.totalorder %s25, 0
      %p73 = por %p71, %p72
      %s74 = ssub.s32 %s28, %s37
      %s75 = ssub.s32 %s27, %s41
      %s76 = sor.u32 %s74, %s75
      %p77 = scmp.eq.s32.totalorder %s76, 0
      %s79 = sadd.s32 %s78, 1
      %s80 = scalar_select %p77, %s78, %s79
      %p83 = pneg %p77
      %p84 = scmp.eq.s32.totalorder %s19, 3
      %p85 = por %p83, %p84
      %p86 = scmp.ne.s32.totalorder %s78, %s81
      %p87 = scmp.eq.s32.totalorder %s19, 0
      %p88 = por %p86, %p87
      %p89 = scmp.ne.s32.totalorder %s78, %s81
      %p90 = scmp.eq.s32.totalorder %s24, 3
      %p91 = por %p89, %p90
      %p92 = scmp.ne.s32.totalorder %s81, %s82
      %p93 = scmp.eq.s32.totalorder %s24, 0
      %p94 = por %p92, %p93
      %p95 = scmp.ne.s32.totalorder %s81, %s82
      %p96 = scmp.eq.s32.totalorder %s25, 3
      %p97 = por %p95, %p96
      %p99 = scmp.ne.s32.totalorder %s82, %s98
      %p100 = scmp.eq.s32.totalorder %s25, 0
      %p101 = por %p99, %p100
      %s102 = ssub.s32 %s28, %s37
      %s103 = ssub.s32 %s27, %s41
      %s104 = sor.u32 %s102, %s103
      %p105 = scmp.eq.s32.totalorder %s104, 0
      %s107 = sadd.s32 %s106, 1
      %s108 = scalar_select %p105, %s106, %s107
      %p111 = pneg %p105
      %p112 = scmp.eq.s32.totalorder %s19, 3
      %p113 = por %p111, %p112
      %p114 = scmp.ne.s32.totalorder %s106, %s109
      %p115 = scmp.eq.s32.totalorder %s19, 0
      %p116 = por %p114, %p115
      %p117 = scmp.ne.s32.totalorder %s106, %s109
      %p118 = scmp.eq.s32.totalorder %s24, 3
      %p119 = por %p117, %p118
      %p120 = scmp.ne.s32.totalorder %s109, %s110
      %p121 = scmp.eq.s32.totalorder %s24, 0
      %p122 = por %p120, %p121
      %p123 = scmp.ne.s32.totalorder %s109, %s110
      %p124 = scmp.eq.s32.totalorder %s25, 3
      %p125 = por %p123, %p124
      %p127 = scmp.ne.s32.totalorder %s110, %s126
      %p128 = scmp.eq.s32.totalorder %s25, 0
      %p129 = por %p127, %p128
      %s130 = ssub.s32 %s27, %s41
      %p131 = scmp.eq.s32.totalorder %s130, 0
      %s133 = sadd.s32 %s132, 1
      %s134 = scalar_select %p131, %s132, %s133
      %p137 = pneg %p131
      %p138 = scmp.eq.s32.totalorder %s19, 3
      %p139 = por %p137, %p138
      %p140 = scmp.ne.s32.totalorder %s132, %s135
      %p141 = scmp.eq.s32.totalorder %s19, 0
      %p142 = por %p140, %p141
      %p143 = scmp.ne.s32.totalorder %s132, %s135
      %p144 = scmp.eq.s32.totalorder %s24, 3
      %p145 = por %p143, %p144
      %p146 = scmp.ne.s32.totalorder %s135, %s136
      %p147 = scmp.eq.s32.totalorder %s24, 0
      %p148 = por %p146, %p147
      %p149 = scmp.ne.s32.totalorder %s135, %s136
      %p150 = scmp.eq.s32.totalorder %s25, 3
      %p151 = por %p149, %p150
      %p153 = scmp.ne.s32.totalorder %s136, %s152
      %p154 = scmp.eq.s32.totalorder %s25, 0
      %p155 = por %p153, %p154
      %s156 = ssub.s32 %s26, %s45
      %s157 = ssub.s32 %s27, %s41
      %s158 = sor.u32 %s156, %s157
      %p159 = scmp.eq.s32.totalorder %s158, 0
      %s161 = sadd.s32 %s160, 1
      %s162 = scalar_select %p159, %s160, %s161
      %p165 = pneg %p159
      %p166 = scmp.eq.s32.totalorder %s19, 3
      %p167 = por %p165, %p166
      %p168 = scmp.ne.s32.totalorder %s160, %s163
      %p169 = scmp.eq.s32.totalorder %s19, 0
      %p170 = por %p168, %p169
      %p171 = scmp.ne.s32.totalorder %s160, %s163
      %p172 = scmp.eq.s32.totalorder %s24, 3
      %p173 = por %p171, %p172
      %p174 = scmp.ne.s32.totalorder %s163, %s164
      %p175 = scmp.eq.s32.totalorder %s24, 0
      %p176 = por %p174, %p175
      %p177 = scmp.ne.s32.totalorder %s163, %s164
      %p178 = scmp.eq.s32.totalorder %s25, 3
      %p179 = por %p177, %p178
      %p181 = scmp.ne.s32.totalorder %s164, %s180
      %p182 = scmp.eq.s32.totalorder %s25, 0
      %p183 = por %p181, %p182
      %p184 = scmp.le.s32.totalorder 1, %s19
      %p185 = scmp.lt.s32.totalorder %s19, 5
      %p186 = pnand %p184, %p185
      %p187 = pneg %p186
      // Predicated region
      $region9: #{qres_forward.1} parent=5 // pred_check
        _
      $region10: #{qres_forward.1} parent=5 // pred_check_branch
        %189 = sbr.rel (%p186) target = $region12
      $region11: #{qres_forward.1} parent=5 // pred_region
        %s190 = ssub.s32 %s19, 1
      $region12: #{qres_forward.1} parent=5 // pred_fallthru
        _
      %p191 = scmp.lt.s32.totalorder %s19, 4
      // Predicated region
      $region13: #{qres_forward.1} parent=5 // pred_check
        %p192 = pneg %p191
      $region14: #{qres_forward.1} parent=5 // pred_check_branch
        %194 = sbr.rel (%p192) target = $region16
      $region15: #{qres_forward.1} parent=5 // pred_region
        // Predicated region
        $region17: #{qres_forward.1} parent=15 // pred_check
          %p195 = pneg %p60
        $region18: #{qres_forward.1} parent=15 // pred_check_branch
          %197 = sbr.rel (%p195) target = $region20
        $region19: #{qres_forward.1} parent=15 // pred_region
          %s198 = smul.u32 4, %s28
          %p199 = scmp.lt.s32.totalorder %s26, 0
          %s200 = scalar_select %p199, %s26, 0
          %p201 = scmp.lt.s32.totalorder %s198, 7
          %s202 = scalar_select %p201, %s198, 7
          %s203 = smul.addr %s200, 8
          %s204 = sadd.s32 %s202, %s203
          %s205 = smul.addr %s204, 4
          %s206 = scalar_lea.vmem %s0, %s205
          %s207 = smul.u32 4, %s28
        $region20: #{qres_forward.1} parent=15 // pred_fallthru
          _
        // Predicated region
        $region21: #{qres_forward.1} parent=15 // pred_check
          %p208 = pneg %p88
        $region22: #{qres_forward.1} parent=15 // pred_check_branch
          %210 = sbr.rel (%p208) target = $region24
        $region23: #{qres_forward.1} parent=15 // pred_region
          %s211 = sand.u32 %s78, 1
          %s212 = scalar_lea.sflag [#allocation5], %s211
          %s213 = sand.u32 %s78, 1
          %s214 = smul.addr %s213, 1024
          %s215 = scalar_lea.vmem [#allocation4], %s214
          %s216 = smul.u32 64, %s28
          %s217 = smul.u32 4, %s27
          %219 = vsyncadd %s212, 0
          %s220 = smul.addr %s216, 8
          %s221 = sadd.s32 %s217, %s220
          %s222 = smul.addr %s221, 4
          %s223 = scalar_lea.hbm %s1, %s222
          %s224 = sshll.u32 %s223, 4
          %s225 = int_to_ptr.hbm [resolvable:$true] %s224
          %s226 = sshll.u32 %s215, 4
          %s227 = int_to_ptr.vmem [resolvable:$true] %s226
          %232 = dma.hbm_to_vmem [thread:$0]  %s225, 16384, %s227, %s212, 512, 256, 16
        $region24: #{qres_forward.1} parent=15 // pred_fallthru
          _
        // Predicated region
        $region25: #{qres_forward.1} parent=15 // pred_check
          %p233 = pneg %p116
        $region26: #{qres_forward.1} parent=15 // pred_check_branch
          %235 = sbr.rel (%p233) target = $region28
        $region27: #{qres_forward.1} parent=15 // pred_region
          %s236 = sand.u32 %s19, 1
          %s237 = scalar_lea.sflag [#allocation8], %s236
          %s238 = sand.u32 %s106, 1
          %s239 = smul.addr %s238, 1024
          %s240 = scalar_lea.vmem [#allocation7], %s239
          %s241 = smul.u32 64, %s28
          %s242 = smul.u32 4, %s27
          %244 = vsyncadd %s237, 0
          %s245 = smul.addr %s241, 8
          %s246 = sadd.s32 %s242, %s245
          %s247 = smul.addr %s246, 4
          %s248 = scalar_lea.hbm %s2, %s247
          %s249 = sshll.u32 %s248, 4
          %s250 = int_to_ptr.hbm [resolvable:$true] %s249
          %s251 = sshll.u32 %s240, 4
          %s252 = int_to_ptr.vmem [resolvable:$true] %s251
          %257 = dma.hbm_to_vmem [thread:$0]  %s250, 16384, %s252, %s237, 512, 256, 16
        $region28: #{qres_forward.1} parent=15 // pred_fallthru
          _
        // Predicated region
        $region29: #{qres_forward.1} parent=15 // pred_check
          %p258 = pneg %p142
        $region30: #{qres_forward.1} parent=15 // pred_check_branch
          %260 = sbr.rel (%p258) target = $region32
        $region31: #{qres_forward.1} parent=15 // pred_region
          %s261 = sand.u32 %s19, 1
          %s262 = scalar_lea.sflag [#allocation8], %s261
          %s263 = sand.u32 %s132, 1
          %s264 = smul.addr %s263, 4
          %s265 = scalar_lea.vmem [#allocation9], %s264
          %s266 = smul.u32 4, %s27
          %268 = vsyncadd %s262, 0
          %s269 = scalar_lea.hbm %s3, %s266
          %s271 = sshll.u32 %s269, 4
          %s272 = int_to_ptr.hbm [resolvable:$true] %s271
          %s273 = sshll.u32 %s265, 4
          %s274 = int_to_ptr.vmem [resolvable:$true] %s273
          %276 = dma.hbm_to_vmem [thread:$0]  %s272, 64, %s274, %s262
        $region32: #{qres_forward.1} parent=15 // pred_fallthru
          _
      $region16: #{qres_forward.1} parent=5 // pred_fallthru
        _
      %p277 = scmp.le.s32.totalorder 1, %s19
      %p278 = scmp.lt.s32.totalorder %s19, 5
      %p279 = pnand %p277, %p278
      %p280 = pneg %p279
      // Predicated region
      $region33: #{qres_forward.1} parent=5 // pred_check
        _
      $region34: #{qres_forward.1} parent=5 // pred_check_branch
        %282 = sbr.rel (%p279) target = $region36
      $region35: #{qres_forward.1} parent=5 // pred_region
        %s283 = ssub.s32 %s19, 1
        %s284 = sand.u32 %s81, 1
        %s285 = scalar_lea.sflag [#allocation5], %s284
        %s286 = sand.u32 %s81, 1
        %s287 = smul.addr %s286, 1024
        %s288 = scalar_lea.vmem [#allocation4], %s287
        // Predicated region
        $region37: #{qres_forward.1} parent=35 // pred_check
          %p289 = pneg %p94
        $region38: #{qres_forward.1} parent=35 // pred_check_branch
          %291 = sbr.rel (%p289) target = $region40
        $region39: #{qres_forward.1} parent=35 // pred_region
          %293 = dma.done %s285, 16384
        $region40: #{qres_forward.1} parent=35 // pred_fallthru
          _
        %s294 = sand.u32 %s24, 1
        %s295 = scalar_lea.sflag [#allocation8], %s294
        %s296 = sand.u32 %s109, 1
        %s297 = smul.addr %s296, 1024
        %s298 = scalar_lea.vmem [#allocation7], %s297
        // Predicated region
        $region41: #{qres_forward.1} parent=35 // pred_check
          %p299 = pneg %p122
        $region42: #{qres_forward.1} parent=35 // pred_check_branch
          %301 = sbr.rel (%p299) target = $region44
        $region43: #{qres_forward.1} parent=35 // pred_region
          %303 = dma.done %s295, 16384
        $region44: #{qres_forward.1} parent=35 // pred_fallthru
          _
        %s304 = sand.u32 %s24, 1
        %s305 = scalar_lea.sflag [#allocation8], %s304
        %s306 = sand.u32 %s135, 1
        %s307 = smul.addr %s306, 4
        %s308 = scalar_lea.vmem [#allocation9], %s307
        // Predicated region
        $region45: #{qres_forward.1} parent=35 // pred_check
          %p309 = pneg %p148
        $region46: #{qres_forward.1} parent=35 // pred_check_branch
          %311 = sbr.rel (%p309) target = $region48
        $region47: #{qres_forward.1} parent=35 // pred_region
          %313 = dma.done %s305, 64
        $region48: #{qres_forward.1} parent=35 // pred_fallthru
          _
        %s314 = smul.u32 4, %s31
        %p315 = scmp.lt.s32.totalorder %s29, 0
        %s316 = scalar_select %p315, %s29, 0
        %p317 = scmp.lt.s32.totalorder %s314, 7
        %s318 = scalar_select %p317, %s314, 7
        %s319 = smul.addr %s316, 8
        %s320 = sadd.s32 %s318, %s319
        %s321 = smul.addr %s320, 4
        %s322 = scalar_lea.vmem %s0, %s321
        %p323 = pneg %p66
        %p324 = pneg %p63
        %s325 = sand.u32 %s81, 1
        %s326 = scalar_lea.sflag [#allocation5], %s325
        %s327 = sand.u32 %s81, 1
        %s328 = smul.addr %s327, 1024
        %s329 = scalar_lea.vmem [#allocation4], %s328
        %p330 = pneg %p94
        %p331 = pneg %p91
        %s332 = sand.u32 %s24, 1
        %s333 = scalar_lea.sflag [#allocation8], %s332
        %s334 = sand.u32 %s109, 1
        %s335 = smul.addr %s334, 1024
        %s336 = scalar_lea.vmem [#allocation7], %s335
        %p337 = pneg %p122
        %p338 = pneg %p119
        %s339 = sand.u32 %s24, 1
        %s340 = scalar_lea.sflag [#allocation8], %s339
        %s341 = sand.u32 %s135, 1
        %s342 = smul.addr %s341, 4
        %s343 = scalar_lea.vmem [#allocation9], %s342
        %p344 = pneg %p148
        %p345 = pneg %p145
        %p346 = pneg %p176
        %p347 = pneg %p173
        %s348 = sand.u32 %s163, 1
        %s349 = scalar_lea.sflag [#allocation6], %s348
        %s350 = sand.u32 %s163, 1
        %s351 = smul.addr %s350, 32
        %s352 = scalar_lea.vmem [#allocation10], %s351
        %s353 = smul.u32 4, %s31
        %p354 = scmp.lt.s32.totalorder %s29, 0
        %s355 = scalar_select %p354, %s29, 0
        %p356 = scmp.lt.s32.totalorder %s353, 7
        %s357 = scalar_select %p356, %s353, 7
        %s358 = smul.addr %s355, 8
        %s359 = sadd.s32 %s357, %s358
        %s360 = smul.addr %s359, 4
        %s361 = scalar_lea.vmem %s0, %s360
        %s362 = smul.u32 4, %s31
        %s363 = smul.u32 64, %s31
        %s364 = smul.u32 4, %s30
        %s365 = smul.u32 64, %s31
        %s366 = smul.u32 4, %s30
        %s367 = smul.u32 4, %s30
        %s368 = smul.u32 4, %s30
        %p369 = scmp.eq.s32.totalorder %s31, 0
        // Predicated region
        $region49: #{qres_forward.1} parent=35 // pred_check
          %p370 = pneg %p369
        $region50: #{qres_forward.1} parent=35 // pred_check_branch
          %372 = sbr.rel (%p370) target = $region52
        $region51: #{qres_forward.1} parent=35 // pred_region
          %373 = vst [vmem:[#allocation2] sm:$0xff] 0.0
          %374 = vst [vmem:[#allocation2 + $0x8] sm:$0xff] 0.0
          %375 = vst [vmem:[#allocation2 + $0x10] sm:$0xff] 0.0
          %376 = vst [vmem:[#allocation2 + $0x18] sm:$0xff] 0.0
          %377 = vst [vmem:[#allocation3] sm:$0xff] 0.0
          %378 = vst [vmem:[#allocation3 + $0x8] sm:$0xff] 0.0
          %379 = vst [vmem:[#allocation3 + $0x10] sm:$0xff] 0.0
          %380 = vst [vmem:[#allocation3 + $0x18] sm:$0xff] 0.0
        $region52: #{qres_forward.1} parent=35 // pred_fallthru
          _
        %v381 = vld [vmem:[%s361] sm:$0xff]
        %v382 = vld [vmem:[%s361 + $0x8] sm:$0xff]
        %v383 = vld [vmem:[#allocation2] sm:$0xff]
        %v384 = vld [vmem:[#allocation2 + $0x8] sm:$0xff]
        %v385 = vld [vmem:[#allocation2 + $0x10] sm:$0xff]
        %v386 = vld [vmem:[#allocation2 + $0x18] sm:$0xff]
        %v387 = vld [vmem:[%s288] sm:$0xff]
        %v388 = vld [vmem:[%s288 + $0x8] sm:$0xff]
        %v389 = vld [vmem:[%s288 + $0x10] sm:$0xff]
        %v390 = vld [vmem:[%s288 + $0x18] sm:$0xff]
        %v391 = vld [vmem:[%s288 + $0x20] sm:$0xff]
        %v392 = vld [vmem:[%s288 + $0x28] sm:$0xff]
        %v393 = vld [vmem:[%s288 + $0x30] sm:$0xff]
        %v394 = vld [vmem:[%s288 + $0x38] sm:$0xff]
        %v395 = vld [vmem:[%s288 + $0x40] sm:$0xff]
        %v396 = vld [vmem:[%s288 + $0x48] sm:$0xff]
        %v397 = vld [vmem:[%s288 + $0x50] sm:$0xff]
        %v398 = vld [vmem:[%s288 + $0x58] sm:$0xff]
        %v399 = vld [vmem:[%s288 + $0x60] sm:$0xff]
        %v400 = vld [vmem:[%s288 + $0x68] sm:$0xff]
        %v401 = vld [vmem:[%s288 + $0x70] sm:$0xff]
        %v402 = vld [vmem:[%s288 + $0x78] sm:$0xff]
        %v403 = vld [vmem:[%s288 + $0x80] sm:$0xff]
        %v404 = vld [vmem:[%s288 + $0x88] sm:$0xff]
        %v405 = vld [vmem:[%s288 + $0x90] sm:$0xff]
        %v406 = vld [vmem:[%s288 + $0x98] sm:$0xff]
        %v407 = vld [vmem:[%s288 + $0xa0] sm:$0xff]
        %v408 = vld [vmem:[%s288 + $0xa8] sm:$0xff]
        %v409 = vld [vmem:[%s288 + $0xb0] sm:$0xff]
        %v410 = vld [vmem:[%s288 + $0xb8] sm:$0xff]
        %v411 = vld [vmem:[%s288 + $0xc0] sm:$0xff]
        %v412 = vld [vmem:[%s288 + $0xc8] sm:$0xff]
        %v413 = vld [vmem:[%s288 + $0xd0] sm:$0xff]
        %v414 = vld [vmem:[%s288 + $0xd8] sm:$0xff]
        %v415 = vld [vmem:[%s288 + $0xe0] sm:$0xff]
        %v416 = vld [vmem:[%s288 + $0xe8] sm:$0xff]
        %v417 = vld [vmem:[%s288 + $0xf0] sm:$0xff]
        %v418 = vld [vmem:[%s288 + $0xf8] sm:$0xff]
        %v419 = vld [vmem:[%s288 + $0x100] sm:$0xff]
        %v420 = vld [vmem:[%s288 + $0x108] sm:$0xff]
        %v421 = vld [vmem:[%s288 + $0x110] sm:$0xff]
        %v422 = vld [vmem:[%s288 + $0x118] sm:$0xff]
        %v423 = vld [vmem:[%s288 + $0x120] sm:$0xff]
        %v424 = vld [vmem:[%s288 + $0x128] sm:$0xff]
        %v425 = vld [vmem:[%s288 + $0x130] sm:$0xff]
        %v426 = vld [vmem:[%s288 + $0x138] sm:$0xff]
        %v427 = vld [vmem:[%s288 + $0x140] sm:$0xff]
        %v428 = vld [vmem:[%s288 + $0x148] sm:$0xff]
        %v429 = vld [vmem:[%s288 + $0x150] sm:$0xff]
        %v430 = vld [vmem:[%s288 + $0x158] sm:$0xff]
        %v431 = vld [vmem:[%s288 + $0x160] sm:$0xff]
        %v432 = vld [vmem:[%s288 + $0x168] sm:$0xff]
        %v433 = vld [vmem:[%s288 + $0x170] sm:$0xff]
        %v434 = vld [vmem:[%s288 + $0x178] sm:$0xff]
        %v435 = vld [vmem:[%s288 + $0x180] sm:$0xff]
        %v436 = vld [vmem:[%s288 + $0x188] sm:$0xff]
        %v437 = vld [vmem:[%s288 + $0x190] sm:$0xff]
        %v438 = vld [vmem:[%s288 + $0x198] sm:$0xff]
        %v439 = vld [vmem:[%s288 + $0x1a0] sm:$0xff]
        %v440 = vld [vmem:[%s288 + $0x1a8] sm:$0xff]
        %v441 = vld [vmem:[%s288 + $0x1b0] sm:$0xff]
        %v442 = vld [vmem:[%s288 + $0x1b8] sm:$0xff]
        %v443 = vld [vmem:[%s288 + $0x1c0] sm:$0xff]
        %v444 = vld [vmem:[%s288 + $0x1c8] sm:$0xff]
        %v445 = vld [vmem:[%s288 + $0x1d0] sm:$0xff]
        %v446 = vld [vmem:[%s288 + $0x1d8] sm:$0xff]
        %v447 = vld [vmem:[%s288 + $0x1e0] sm:$0xff]
        %v448 = vld [vmem:[%s288 + $0x1e8] sm:$0xff]
        %v449 = vld [vmem:[%s288 + $0x1f0] sm:$0xff]
        %v450 = vld [vmem:[%s288 + $0x1f8] sm:$0xff]
        %v451 = vld [vmem:[%s288 + $0x200] sm:$0xff]
        %v452 = vld [vmem:[%s288 + $0x208] sm:$0xff]
        %v453 = vld [vmem:[%s288 + $0x210] sm:$0xff]
        %v454 = vld [vmem:[%s288 + $0x218] sm:$0xff]
        %v455 = vld [vmem:[%s288 + $0x220] sm:$0xff]
        %v456 = vld [vmem:[%s288 + $0x228] sm:$0xff]
        %v457 = vld [vmem:[%s288 + $0x230] sm:$0xff]
        %v458 = vld [vmem:[%s288 + $0x238] sm:$0xff]
        %v459 = vld [vmem:[%s288 + $0x240] sm:$0xff]
        %v460 = vld [vmem:[%s288 + $0x248] sm:$0xff]
        %v461 = vld [vmem:[%s288 + $0x250] sm:$0xff]
        %v462 = vld [vmem:[%s288 + $0x258] sm:$0xff]
        %v463 = vld [vmem:[%s288 + $0x260] sm:$0xff]
        %v464 = vld [vmem:[%s288 + $0x268] sm:$0xff]
        %v465 = vld [vmem:[%s288 + $0x270] sm:$0xff]
        %v466 = vld [vmem:[%s288 + $0x278] sm:$0xff]
        %v467 = vld [vmem:[%s288 + $0x280] sm:$0xff]
        %v468 = vld [vmem:[%s288 + $0x288] sm:$0xff]
        %v469 = vld [vmem:[%s288 + $0x290] sm:$0xff]
        %v470 = vld [vmem:[%s288 + $0x298] sm:$0xff]
        %v471 = vld [vmem:[%s288 + $0x2a0] sm:$0xff]
        %v472 = vld [vmem:[%s288 + $0x2a8] sm:$0xff]
        %v473 = vld [vmem:[%s288 + $0x2b0] sm:$0xff]
        %v474 = vld [vmem:[%s288 + $0x2b8] sm:$0xff]
        %v475 = vld [vmem:[%s288 + $0x2c0] sm:$0xff]
        %v476 = vld [vmem:[%s288 + $0x2c8] sm:$0xff]
        %v477 = vld [vmem:[%s288 + $0x2d0] sm:$0xff]
        %v478 = vld [vmem:[%s288 + $0x2d8] sm:$0xff]
        %v479 = vld [vmem:[%s288 + $0x2e0] sm:$0xff]
        %v480 = vld [vmem:[%s288 + $0x2e8] sm:$0xff]
        %v481 = vld [vmem:[%s288 + $0x2f0] sm:$0xff]
        %v482 = vld [vmem:[%s288 + $0x2f8] sm:$0xff]
        %v483 = vld [vmem:[%s288 + $0x300] sm:$0xff]
        %v484 = vld [vmem:[%s288 + $0x308] sm:$0xff]
        %v485 = vld [vmem:[%s288 + $0x310] sm:$0xff]
        %v486 = vld [vmem:[%s288 + $0x318] sm:$0xff]
        %v487 = vld [vmem:[%s288 + $0x320] sm:$0xff]
        %v488 = vld [vmem:[%s288 + $0x328] sm:$0xff]
        %v489 = vld [vmem:[%s288 + $0x330] sm:$0xff]
        %v490 = vld [vmem:[%s288 + $0x338] sm:$0xff]
        %v491 = vld [vmem:[%s288 + $0x340] sm:$0xff]
        %v492 = vld [vmem:[%s288 + $0x348] sm:$0xff]
        %v493 = vld [vmem:[%s288 + $0x350] sm:$0xff]
        %v494 = vld [vmem:[%s288 + $0x358] sm:$0xff]
        %v495 = vld [vmem:[%s288 + $0x360] sm:$0xff]
        %v496 = vld [vmem:[%s288 + $0x368] sm:$0xff]
        %v497 = vld [vmem:[%s288 + $0x370] sm:$0xff]
        %v498 = vld [vmem:[%s288 + $0x378] sm:$0xff]
        %v499 = vld [vmem:[%s288 + $0x380] sm:$0xff]
        %v500 = vld [vmem:[%s288 + $0x388] sm:$0xff]
        %v501 = vld [vmem:[%s288 + $0x390] sm:$0xff]
        %v502 = vld [vmem:[%s288 + $0x398] sm:$0xff]
        %v503 = vld [vmem:[%s288 + $0x3a0] sm:$0xff]
        %v504 = vld [vmem:[%s288 + $0x3a8] sm:$0xff]
        %v505 = vld [vmem:[%s288 + $0x3b0] sm:$0xff]
        %v506 = vld [vmem:[%s288 + $0x3b8] sm:$0xff]
        %v507 = vld [vmem:[%s288 + $0x3c0] sm:$0xff]
        %v508 = vld [vmem:[%s288 + $0x3c8] sm:$0xff]
        %v509 = vld [vmem:[%s288 + $0x3d0] sm:$0xff]
        %v510 = vld [vmem:[%s288 + $0x3d8] sm:$0xff]
        %v511 = vld [vmem:[%s288 + $0x3e0] sm:$0xff]
        %v512 = vld [vmem:[%s288 + $0x3e8] sm:$0xff]
        %v513 = vld [vmem:[%s288 + $0x3f0] sm:$0xff]
        %v514 = vld [vmem:[%s288 + $0x3f8] sm:$0xff]
        %v517 = vunpack.c.l.b16 %v381
        %v518 = vunpack.c.h.b16 %v381
        %v519 = vunpack.c.l.b16 %v382
        %v520 = vunpack.c.h.b16 %v382
        %v521 = vpack.c.b16 %v517, %v517
        %v522 = vpack.c.b16 %v518, %v518
        %v523 = vpack.c.b16 %v519, %v519
        %v524 = vpack.c.b16 %v520, %v520
        %v657 = vunpack.c.l.b16 %v387
        %v658 = vunpack.c.h.b16 %v387
        %v659 = vunpack.c.l.b16 %v388
        %v660 = vunpack.c.h.b16 %v388
        %v661 = vunpack.c.l.b16 %v389
        %v662 = vunpack.c.h.b16 %v389
        %v663 = vunpack.c.l.b16 %v390
        %v664 = vunpack.c.h.b16 %v390
        %v665 = vunpack.c.l.b16 %v391
        %v666 = vunpack.c.h.b16 %v391
        %v667 = vunpack.c.l.b16 %v392
        %v668 = vunpack.c.h.b16 %v392
        %v669 = vunpack.c.l.b16 %v393
        %v670 = vunpack.c.h.b16 %v393
        %v671 = vunpack.c.l.b16 %v394
        %v672 = vunpack.c.h.b16 %v394
        %v673 = vunpack.c.l.b16 %v395
        %v674 = vunpack.c.h.b16 %v395
        %v675 = vunpack.c.l.b16 %v396
        %v676 = vunpack.c.h.b16 %v396
        %v677 = vunpack.c.l.b16 %v397
        %v678 = vunpack.c.h.b16 %v397
        %v679 = vunpack.c.l.b16 %v398
        %v680 = vunpack.c.h.b16 %v398
        %v681 = vunpack.c.l.b16 %v399
        %v682 = vunpack.c.h.b16 %v399
        %v683 = vunpack.c.l.b16 %v400
        %v684 = vunpack.c.h.b16 %v400
        %v685 = vunpack.c.l.b16 %v401
        %v686 = vunpack.c.h.b16 %v401
        %v687 = vunpack.c.l.b16 %v402
        %v688 = vunpack.c.h.b16 %v402
        %v689 = vunpack.c.l.b16 %v403
        %v690 = vunpack.c.h.b16 %v403
        %v691 = vunpack.c.l.b16 %v404
        %v692 = vunpack.c.h.b16 %v404
        %v693 = vunpack.c.l.b16 %v405
        %v694 = vunpack.c.h.b16 %v405
        %v695 = vunpack.c.l.b16 %v406
        %v696 = vunpack.c.h.b16 %v406
        %v697 = vunpack.c.l.b16 %v407
        %v698 = vunpack.c.h.b16 %v407
        %v699 = vunpack.c.l.b16 %v408
        %v700 = vunpack.c.h.b16 %v408
        %v701 = vunpack.c.l.b16 %v409
        %v702 = vunpack.c.h.b16 %v409
        %v703 = vunpack.c.l.b16 %v410
        %v704 = vunpack.c.h.b16 %v410
        %v705 = vunpack.c.l.b16 %v411
        %v706 = vunpack.c.h.b16 %v411
        %v707 = vunpack.c.l.b16 %v412
        %v708 = vunpack.c.h.b16 %v412
        %v709 = vunpack.c.l.b16 %v413
        %v710 = vunpack.c.h.b16 %v413
        %v711 = vunpack.c.l.b16 %v414
        %v712 = vunpack.c.h.b16 %v414
        %v713 = vunpack.c.l.b16 %v415
        %v714 = vunpack.c.h.b16 %v415
        %v715 = vunpack.c.l.b16 %v416
        %v716 = vunpack.c.h.b16 %v416
        %v717 = vunpack.c.l.b16 %v417
        %v718 = vunpack.c.h.b16 %v417
        %v719 = vunpack.c.l.b16 %v418
        %v720 = vunpack.c.h.b16 %v418
        %v721 = vunpack.c.l.b16 %v419
        %v722 = vunpack.c.h.b16 %v419
        %v723 = vunpack.c.l.b16 %v420
        %v724 = vunpack.c.h.b16 %v420
        %v725 = vunpack.c.l.b16 %v421
        %v726 = vunpack.c.h.b16 %v421
        %v727 = vunpack.c.l.b16 %v422
        %v728 = vunpack.c.h.b16 %v422
        %v729 = vunpack.c.l.b16 %v423
        %v730 = vunpack.c.h.b16 %v423
        %v731 = vunpack.c.l.b16 %v424
        %v732 = vunpack.c.h.b16 %v424
        %v733 = vunpack.c.l.b16 %v425
        %v734 = vunpack.c.h.b16 %v425
        %v735 = vunpack.c.l.b16 %v426
        %v736 = vunpack.c.h.b16 %v426
        %v737 = vunpack.c.l.b16 %v427
        %v738 = vunpack.c.h.b16 %v427
        %v739 = vunpack.c.l.b16 %v428
        %v740 = vunpack.c.h.b16 %v428
        %v741 = vunpack.c.l.b16 %v429
        %v742 = vunpack.c.h.b16 %v429
        %v743 = vunpack.c.l.b16 %v430
        %v744 = vunpack.c.h.b16 %v430
        %v745 = vunpack.c.l.b16 %v431
        %v746 = vunpack.c.h.b16 %v431
        %v747 = vunpack.c.l.b16 %v432
        %v748 = vunpack.c.h.b16 %v432
        %v749 = vunpack.c.l.b16 %v433
        %v750 = vunpack.c.h.b16 %v433
        %v751 = vunpack.c.l.b16 %v434
        %v752 = vunpack.c.h.b16 %v434
        %v753 = vunpack.c.l.b16 %v435
        %v754 = vunpack.c.h.b16 %v435
        %v755 = vunpack.c.l.b16 %v436
        %v756 = vunpack.c.h.b16 %v436
        %v757 = vunpack.c.l.b16 %v437
        %v758 = vunpack.c.h.b16 %v437
        %v759 = vunpack.c.l.b16 %v438
        %v760 = vunpack.c.h.b16 %v438
        %v761 = vunpack.c.l.b16 %v439
        %v762 = vunpack.c.h.b16 %v439
        %v763 = vunpack.c.l.b16 %v440
        %v764 = vunpack.c.h.b16 %v440
        %v765 = vunpack.c.l.b16 %v441
        %v766 = vunpack.c.h.b16 %v441
        %v767 = vunpack.c.l.b16 %v442
        %v768 = vunpack.c.h.b16 %v442
        %v769 = vunpack.c.l.b16 %v443
        %v770 = vunpack.c.h.b16 %v443
        %v771 = vunpack.c.l.b16 %v444
        %v772 = vunpack.c.h.b16 %v444
        %v773 = vunpack.c.l.b16 %v445
        %v774 = vunpack.c.h.b16 %v445
        %v775 = vunpack.c.l.b16 %v446
        %v776 = vunpack.c.h.b16 %v446
        %v777 = vunpack.c.l.b16 %v447
        %v778 = vunpack.c.h.b16 %v447
        %v779 = vunpack.c.l.b16 %v448
        %v780 = vunpack.c.h.b16 %v448
        %v781 = vunpack.c.l.b16 %v449
        %v782 = vunpack.c.h.b16 %v449
        %v783 = vunpack.c.l.b16 %v450
        %v784 = vunpack.c.h.b16 %v450
        %v785 = vunpack.c.l.b16 %v451
        %v786 = vunpack.c.h.b16 %v451
        %v787 = vunpack.c.l.b16 %v452
        %v788 = vunpack.c.h.b16 %v452
        %v789 = vunpack.c.l.b16 %v453
        %v790 = vunpack.c.h.b16 %v453
        %v791 = vunpack.c.l.b16 %v454
        %v792 = vunpack.c.h.b16 %v454
        %v793 = vunpack.c.l.b16 %v455
        %v794 = vunpack.c.h.b16 %v455
        %v795 = vunpack.c.l.b16 %v456
        %v796 = vunpack.c.h.b16 %v456
        %v797 = vunpack.c.l.b16 %v457
        %v798 = vunpack.c.h.b16 %v457
        %v799 = vunpack.c.l.b16 %v458
        %v800 = vunpack.c.h.b16 %v458
        %v801 = vunpack.c.l.b16 %v459
        %v802 = vunpack.c.h.b16 %v459
        %v803 = vunpack.c.l.b16 %v460
        %v804 = vunpack.c.h.b16 %v460
        %v805 = vunpack.c.l.b16 %v461
        %v806 = vunpack.c.h.b16 %v461
        %v807 = vunpack.c.l.b16 %v462
        %v808 = vunpack.c.h.b16 %v462
        %v809 = vunpack.c.l.b16 %v463
        %v810 = vunpack.c.h.b16 %v463
        %v811 = vunpack.c.l.b16 %v464
        %v812 = vunpack.c.h.b16 %v464
        %v813 = vunpack.c.l.b16 %v465
        %v814 = vunpack.c.h.b16 %v465
        %v815 = vunpack.c.l.b16 %v466
        %v816 = vunpack.c.h.b16 %v466
        %v817 = vunpack.c.l.b16 %v467
        %v818 = vunpack.c.h.b16 %v467
        %v819 = vunpack.c.l.b16 %v468
        %v820 = vunpack.c.h.b16 %v468
        %v821 = vunpack.c.l.b16 %v469
        %v822 = vunpack.c.h.b16 %v469
        %v823 = vunpack.c.l.b16 %v470
        %v824 = vunpack.c.h.b16 %v470
        %v825 = vunpack.c.l.b16 %v471
        %v826 = vunpack.c.h.b16 %v471
        %v827 = vunpack.c.l.b16 %v472
        %v828 = vunpack.c.h.b16 %v472
        %v829 = vunpack.c.l.b16 %v473
        %v830 = vunpack.c.h.b16 %v473
        %v831 = vunpack.c.l.b16 %v474
        %v832 = vunpack.c.h.b16 %v474
        %v833 = vunpack.c.l.b16 %v475
        %v834 = vunpack.c.h.b16 %v475
        %v835 = vunpack.c.l.b16 %v476
        %v836 = vunpack.c.h.b16 %v476
        %v837 = vunpack.c.l.b16 %v477
        %v838 = vunpack.c.h.b16 %v477
        %v839 = vunpack.c.l.b16 %v478
        %v840 = vunpack.c.h.b16 %v478
        %v841 = vunpack.c.l.b16 %v479
        %v842 = vunpack.c.h.b16 %v479
        %v843 = vunpack.c.l.b16 %v480
        %v844 = vunpack.c.h.b16 %v480
        %v845 = vunpack.c.l.b16 %v481
        %v846 = vunpack.c.h.b16 %v481
        %v847 = vunpack.c.l.b16 %v482
        %v848 = vunpack.c.h.b16 %v482
        %v849 = vunpack.c.l.b16 %v483
        %v850 = vunpack.c.h.b16 %v483
        %v851 = vunpack.c.l.b16 %v484
        %v852 = vunpack.c.h.b16 %v484
        %v853 = vunpack.c.l.b16 %v485
        %v854 = vunpack.c.h.b16 %v485
        %v855 = vunpack.c.l.b16 %v486
        %v856 = vunpack.c.h.b16 %v486
        %v857 = vunpack.c.l.b16 %v487
        %v858 = vunpack.c.h.b16 %v487
        %v859 = vunpack.c.l.b16 %v488
        %v860 = vunpack.c.h.b16 %v488
        %v861 = vunpack.c.l.b16 %v489
        %v862 = vunpack.c.h.b16 %v489
        %v863 = vunpack.c.l.b16 %v490
        %v864 = vunpack.c.h.b16 %v490
        %v865 = vunpack.c.l.b16 %v491
        %v866 = vunpack.c.h.b16 %v491
        %v867 = vunpack.c.l.b16 %v492
        %v868 = vunpack.c.h.b16 %v492
        %v869 = vunpack.c.l.b16 %v493
        %v870 = vunpack.c.h.b16 %v493
        %v871 = vunpack.c.l.b16 %v494
        %v872 = vunpack.c.h.b16 %v494
        %v873 = vunpack.c.l.b16 %v495
        %v874 = vunpack.c.h.b16 %v495
        %v875 = vunpack.c.l.b16 %v496
        %v876 = vunpack.c.h.b16 %v496
        %v877 = vunpack.c.l.b16 %v497
        %v878 = vunpack.c.h.b16 %v497
        %v879 = vunpack.c.l.b16 %v498
        %v880 = vunpack.c.h.b16 %v498
        %v881 = vunpack.c.l.b16 %v499
        %v882 = vunpack.c.h.b16 %v499
        %v883 = vunpack.c.l.b16 %v500
        %v884 = vunpack.c.h.b16 %v500
        %v885 = vunpack.c.l.b16 %v501
        %v886 = vunpack.c.h.b16 %v501
        %v887 = vunpack.c.l.b16 %v502
        %v888 = vunpack.c.h.b16 %v502
        %v889 = vunpack.c.l.b16 %v503
        %v890 = vunpack.c.h.b16 %v503
        %v891 = vunpack.c.l.b16 %v504
        %v892 = vunpack.c.h.b16 %v504
        %v893 = vunpack.c.l.b16 %v505
        %v894 = vunpack.c.h.b16 %v505
        %v895 = vunpack.c.l.b16 %v506
        %v896 = vunpack.c.h.b16 %v506
        %v897 = vunpack.c.l.b16 %v507
        %v898 = vunpack.c.h.b16 %v507
        %v899 = vunpack.c.l.b16 %v508
        %v900 = vunpack.c.h.b16 %v508
        %v901 = vunpack.c.l.b16 %v509
        %v902 = vunpack.c.h.b16 %v509
        %v903 = vunpack.c.l.b16 %v510
        %v904 = vunpack.c.h.b16 %v510
        %v905 = vunpack.c.l.b16 %v511
        %v906 = vunpack.c.h.b16 %v511
        %v907 = vunpack.c.l.b16 %v512
        %v908 = vunpack.c.h.b16 %v512
        %v909 = vunpack.c.l.b16 %v513
        %v910 = vunpack.c.h.b16 %v513
        %v911 = vunpack.c.l.b16 %v514
        %v912 = vunpack.c.h.b16 %v514
        %v913 = vpack.c.b16 %v661, %v657
        %v914 = vpack.c.b16 %v662, %v658
        %v915 = vpack.c.b16 %v663, %v659
        %v916 = vpack.c.b16 %v664, %v660
        %v917 = vpack.c.b16 %v669, %v665
        %v918 = vpack.c.b16 %v670, %v666
        %v919 = vpack.c.b16 %v671, %v667
        %v920 = vpack.c.b16 %v672, %v668
        %v921 = vpack.c.b16 %v677, %v673
        %v922 = vpack.c.b16 %v678, %v674
        %v923 = vpack.c.b16 %v679, %v675
        %v924 = vpack.c.b16 %v680, %v676
        %v925 = vpack.c.b16 %v685, %v681
        %v926 = vpack.c.b16 %v686, %v682
        %v927 = vpack.c.b16 %v687, %v683
        %v928 = vpack.c.b16 %v688, %v684
        %v929 = vpack.c.b16 %v693, %v689
        %v930 = vpack.c.b16 %v694, %v690
        %v931 = vpack.c.b16 %v695, %v691
        %v932 = vpack.c.b16 %v696, %v692
        %v933 = vpack.c.b16 %v701, %v697
        %v934 = vpack.c.b16 %v702, %v698
        %v935 = vpack.c.b16 %v703, %v699
        %v936 = vpack.c.b16 %v704, %v700
        %v937 = vpack.c.b16 %v709, %v705
        %v938 = vpack.c.b16 %v710, %v706
        %v939 = vpack.c.b16 %v711, %v707
        %v940 = vpack.c.b16 %v712, %v708
        %v941 = vpack.c.b16 %v717, %v713
        %v942 = vpack.c.b16 %v718, %v714
        %v943 = vpack.c.b16 %v719, %v715
        %v944 = vpack.c.b16 %v720, %v716
        %v945 = vpack.c.b16 %v725, %v721
        %v946 = vpack.c.b16 %v726, %v722
        %v947 = vpack.c.b16 %v727, %v723
        %v948 = vpack.c.b16 %v728, %v724
        %v949 = vpack.c.b16 %v733, %v729
        %v950 = vpack.c.b16 %v734, %v730
        %v951 = vpack.c.b16 %v735, %v731
        %v952 = vpack.c.b16 %v736, %v732
        %v953 = vpack.c.b16 %v741, %v737
        %v954 = vpack.c.b16 %v742, %v738
        %v955 = vpack.c.b16 %v743, %v739
        %v956 = vpack.c.b16 %v744, %v740
        %v957 = vpack.c.b16 %v749, %v745
        %v958 = vpack.c.b16 %v750, %v746
        %v959 = vpack.c.b16 %v751, %v747
        %v960 = vpack.c.b16 %v752, %v748
        %v961 = vpack.c.b16 %v757, %v753
        %v962 = vpack.c.b16 %v758, %v754
        %v963 = vpack.c.b16 %v759, %v755
        %v964 = vpack.c.b16 %v760, %v756
        %v965 = vpack.c.b16 %v765, %v761
        %v966 = vpack.c.b16 %v766, %v762
        %v967 = vpack.c.b16 %v767, %v763
        %v968 = vpack.c.b16 %v768, %v764
        %v969 = vpack.c.b16 %v773, %v769
        %v970 = vpack.c.b16 %v774, %v770
        %v971 = vpack.c.b16 %v775, %v771
        %v972 = vpack.c.b16 %v776, %v772
        %v973 = vpack.c.b16 %v781, %v777
        %v974 = vpack.c.b16 %v782, %v778
        %v975 = vpack.c.b16 %v783, %v779
        %v976 = vpack.c.b16 %v784, %v780
        %v977 = vpack.c.b16 %v789, %v785
        %v978 = vpack.c.b16 %v790, %v786
        %v979 = vpack.c.b16 %v791, %v787
        %v980 = vpack.c.b16 %v792, %v788
        %v981 = vpack.c.b16 %v797, %v793
        %v982 = vpack.c.b16 %v798, %v794
        %v983 = vpack.c.b16 %v799, %v795
        %v984 = vpack.c.b16 %v800, %v796
        %v985 = vpack.c.b16 %v805, %v801
        %v986 = vpack.c.b16 %v806, %v802
        %v987 = vpack.c.b16 %v807, %v803
        %v988 = vpack.c.b16 %v808, %v804
        %v989 = vpack.c.b16 %v813, %v809
        %v990 = vpack.c.b16 %v814, %v810
        %v991 = vpack.c.b16 %v815, %v811
        %v992 = vpack.c.b16 %v816, %v812
        %v993 = vpack.c.b16 %v821, %v817
        %v994 = vpack.c.b16 %v822, %v818
        %v995 = vpack.c.b16 %v823, %v819
        %v996 = vpack.c.b16 %v824, %v820
        %v997 = vpack.c.b16 %v829, %v825
        %v998 = vpack.c.b16 %v830, %v826
        %v999 = vpack.c.b16 %v831, %v827
        %v1000 = vpack.c.b16 %v832, %v828
        %v1001 = vpack.c.b16 %v837, %v833
        %v1002 = vpack.c.b16 %v838, %v834
        %v1003 = vpack.c.b16 %v839, %v835
        %v1004 = vpack.c.b16 %v840, %v836
        %v1005 = vpack.c.b16 %v845, %v841
        %v1006 = vpack.c.b16 %v846, %v842
        %v1007 = vpack.c.b16 %v847, %v843
        %v1008 = vpack.c.b16 %v848, %v844
        %v1009 = vpack.c.b16 %v853, %v849
        %v1010 = vpack.c.b16 %v854, %v850
        %v1011 = vpack.c.b16 %v855, %v851
        %v1012 = vpack.c.b16 %v856, %v852
        %v1013 = vpack.c.b16 %v861, %v857
        %v1014 = vpack.c.b16 %v862, %v858
        %v1015 = vpack.c.b16 %v863, %v859
        %v1016 = vpack.c.b16 %v864, %v860
        %v1017 = vpack.c.b16 %v869, %v865
        %v1018 = vpack.c.b16 %v870, %v866
        %v1019 = vpack.c.b16 %v871, %v867
        %v1020 = vpack.c.b16 %v872, %v868
        %v1021 = vpack.c.b16 %v877, %v873
        %v1022 = vpack.c.b16 %v878, %v874
        %v1023 = vpack.c.b16 %v879, %v875
        %v1024 = vpack.c.b16 %v880, %v876
        %v1025 = vpack.c.b16 %v885, %v881
        %v1026 = vpack.c.b16 %v886, %v882
        %v1027 = vpack.c.b16 %v887, %v883
        %v1028 = vpack.c.b16 %v888, %v884
        %v1029 = vpack.c.b16 %v893, %v889
        %v1030 = vpack.c.b16 %v894, %v890
        %v1031 = vpack.c.b16 %v895, %v891
        %v1032 = vpack.c.b16 %v896, %v892
        %v1033 = vpack.c.b16 %v901, %v897
        %v1034 = vpack.c.b16 %v902, %v898
        %v1035 = vpack.c.b16 %v903, %v899
        %v1036 = vpack.c.b16 %v904, %v900
        %v1037 = vpack.c.b16 %v909, %v905
        %v1038 = vpack.c.b16 %v910, %v906
        %v1039 = vpack.c.b16 %v911, %v907
        %v1040 = vpack.c.b16 %v912, %v908
        %1169 = vmatpush.bf16.msra.mxu0 %v941
        %1170 = vmatpush.bf16.msra.mxu0 %v937
        %1171 = vmatpush.bf16.msra.mxu0 %v933
        %1172 = vmatpush.bf16.msra.mxu0 %v929
        %1173 = vmatpush.bf16.msra.mxu0 %v925
        %1174 = vmatpush.bf16.msra.mxu0 %v921
        %1175 = vmatpush.bf16.msra.mxu0 %v917
        %1176 = vmatpush.bf16.msra.mxu0 %v913
        %1177 = vmatmul.bf16.gmra.mxu0 %v521
        %v1178 = vpop.f32.mrf.mxu0
        %v1179 = vadd.f32 0.0, %v1178
        %v1180 = vpop.f32.mrf.mxu0
        %1181 = vdwg.mxu0
        %1182 = vmatpush.bf16.msra.mxu0 %v973
        %1183 = vmatpush.bf16.msra.mxu0 %v969
        %1184 = vmatpush.bf16.msra.mxu0 %v965
        %1185 = vmatpush.bf16.msra.mxu0 %v961
        %1186 = vmatpush.bf16.msra.mxu0 %v957
        %1187 = vmatpush.bf16.msra.mxu0 %v953
        %1188 = vmatpush.bf16.msra.mxu0 %v949
        %1189 = vmatpush.bf16.msra.mxu0 %v945
        %1190 = vmatmul.bf16.gmra.mxu0 %v522
        %v1191 = vpop.f32.mrf.mxu0
        %v1192 = vadd.f32 %v1179, %v1191
        %v1193 = vpop.f32.mrf.mxu0
        %1194 = vdwg.mxu0
        %1195 = vmatpush.bf16.msra.mxu0 %v1005
        %1196 = vmatpush.bf16.msra.mxu0 %v1001
        %1197 = vmatpush.bf16.msra.mxu0 %v997
        %1198 = vmatpush.bf16.msra.mxu0 %v993
        %1199 = vmatpush.bf16.msra.mxu0 %v989
        %1200 = vmatpush.bf16.msra.mxu0 %v985
        %1201 = vmatpush.bf16.msra.mxu0 %v981
        %1202 = vmatpush.bf16.msra.mxu0 %v977
        %1203 = vmatmul.bf16.gmra.mxu0 %v523
        %v1204 = vpop.f32.mrf.mxu0
        %v1205 = vadd.f32 %v1192, %v1204
        %v1206 = vpop.f32.mrf.mxu0
        %1207 = vdwg.mxu0
        %1208 = vmatpush.bf16.msra.mxu0 %v1037
        %1209 = vmatpush.bf16.msra.mxu0 %v1033
        %1210 = vmatpush.bf16.msra.mxu0 %v1029
        %1211 = vmatpush.bf16.msra.mxu0 %v1025
        %1212 = vmatpush.bf16.msra.mxu0 %v1021
        %1213 = vmatpush.bf16.msra.mxu0 %v1017
        %1214 = vmatpush.bf16.msra.mxu0 %v1013
        %1215 = vmatpush.bf16.msra.mxu0 %v1009
        %1216 = vmatmul.bf16.gmra.mxu0 %v524
        %v1217 = vpop.f32.mrf.mxu0
        %v1218 = vadd.f32 %v1205, %v1217
        %v1219 = vpop.f32.mrf.mxu0
        %1220 = vdwg.mxu0
        %1221 = vmatpush.bf16.msra.mxu0 %v942
        %1222 = vmatpush.bf16.msra.mxu0 %v938
        %1223 = vmatpush.bf16.msra.mxu0 %v934
        %1224 = vmatpush.bf16.msra.mxu0 %v930
        %1225 = vmatpush.bf16.msra.mxu0 %v926
        %1226 = vmatpush.bf16.msra.mxu0 %v922
        %1227 = vmatpush.bf16.msra.mxu0 %v918
        %1228 = vmatpush.bf16.msra.mxu0 %v914
        %1229 = vmatmul.bf16.gmra.mxu0 %v521
        %v1230 = vpop.f32.mrf.mxu0
        %v1231 = vadd.f32 0.0, %v1230
        %v1232 = vpop.f32.mrf.mxu0
        %1233 = vdwg.mxu0
        %1234 = vmatpush.bf16.msra.mxu0 %v974
        %1235 = vmatpush.bf16.msra.mxu0 %v970
        %1236 = vmatpush.bf16.msra.mxu0 %v966
        %1237 = vmatpush.bf16.msra.mxu0 %v962
        %1238 = vmatpush.bf16.msra.mxu0 %v958
        %1239 = vmatpush.bf16.msra.mxu0 %v954
        %1240 = vmatpush.bf16.msra.mxu0 %v950
        %1241 = vmatpush.bf16.msra.mxu0 %v946
        %1242 = vmatmul.bf16.gmra.mxu0 %v522
        %v1243 = vpop.f32.mrf.mxu0
        %v1244 = vadd.f32 %v1231, %v1243
        %v1245 = vpop.f32.mrf.mxu0
        %1246 = vdwg.mxu0
        %1247 = vmatpush.bf16.msra.mxu0 %v1006
        %1248 = vmatpush.bf16.msra.mxu0 %v1002
        %1249 = vmatpush.bf16.msra.mxu0 %v998
        %1250 = vmatpush.bf16.msra.mxu0 %v994
        %1251 = vmatpush.bf16.msra.mxu0 %v990
        %1252 = vmatpush.bf16.msra.mxu0 %v986
        %1253 = vmatpush.bf16.msra.mxu0 %v982
        %1254 = vmatpush.bf16.msra.mxu0 %v978
        %1255 = vmatmul.bf16.gmra.mxu0 %v523
        %v1256 = vpop.f32.mrf.mxu0
        %v1257 = vadd.f32 %v1244, %v1256
        %v1258 = vpop.f32.mrf.mxu0
        %1259 = vdwg.mxu0
        %1260 = vmatpush.bf16.msra.mxu0 %v1038
        %1261 = vmatpush.bf16.msra.mxu0 %v1034
        %1262 = vmatpush.bf16.msra.mxu0 %v1030
        %1263 = vmatpush.bf16.msra.mxu0 %v1026
        %1264 = vmatpush.bf16.msra.mxu0 %v1022
        %1265 = vmatpush.bf16.msra.mxu0 %v1018
        %1266 = vmatpush.bf16.msra.mxu0 %v1014
        %1267 = vmatpush.bf16.msra.mxu0 %v1010
        %1268 = vmatmul.bf16.gmra.mxu0 %v524
        %v1269 = vpop.f32.mrf.mxu0
        %v1270 = vadd.f32 %v1257, %v1269
        %v1271 = vpop.f32.mrf.mxu0
        %1272 = vdwg.mxu0
        %1273 = vmatpush.bf16.msra.mxu0 %v943
        %1274 = vmatpush.bf16.msra.mxu0 %v939
        %1275 = vmatpush.bf16.msra.mxu0 %v935
        %1276 = vmatpush.bf16.msra.mxu0 %v931
        %1277 = vmatpush.bf16.msra.mxu0 %v927
        %1278 = vmatpush.bf16.msra.mxu0 %v923
        %1279 = vmatpush.bf16.msra.mxu0 %v919
        %1280 = vmatpush.bf16.msra.mxu0 %v915
        %1281 = vmatmul.bf16.gmra.mxu0 %v521
        %v1282 = vpop.f32.mrf.mxu0
        %v1283 = vadd.f32 0.0, %v1282
        %v1284 = vpop.f32.mrf.mxu0
        %1285 = vdwg.mxu0
        %1286 = vmatpush.bf16.msra.mxu0 %v975
        %1287 = vmatpush.bf16.msra.mxu0 %v971
        %1288 = vmatpush.bf16.msra.mxu0 %v967
        %1289 = vmatpush.bf16.msra.mxu0 %v963
        %1290 = vmatpush.bf16.msra.mxu0 %v959
        %1291 = vmatpush.bf16.msra.mxu0 %v955
        %1292 = vmatpush.bf16.msra.mxu0 %v951
        %1293 = vmatpush.bf16.msra.mxu0 %v947
        %1294 = vmatmul.bf16.gmra.mxu0 %v522
        %v1295 = vpop.f32.mrf.mxu0
        %v1296 = vadd.f32 %v1283, %v1295
        %v1297 = vpop.f32.mrf.mxu0
        %1298 = vdwg.mxu0
        %1299 = vmatpush.bf16.msra.mxu0 %v1007
        %1300 = vmatpush.bf16.msra.mxu0 %v1003
        %1301 = vmatpush.bf16.msra.mxu0 %v999
        %1302 = vmatpush.bf16.msra.mxu0 %v995
        %1303 = vmatpush.bf16.msra.mxu0 %v991
        %1304 = vmatpush.bf16.msra.mxu0 %v987
        %1305 = vmatpush.bf16.msra.mxu0 %v983
        %1306 = vmatpush.bf16.msra.mxu0 %v979
        %1307 = vmatmul.bf16.gmra.mxu0 %v523
        %v1308 = vpop.f32.mrf.mxu0
        %v1309 = vadd.f32 %v1296, %v1308
        %v1310 = vpop.f32.mrf.mxu0
        %1311 = vdwg.mxu0
        %1312 = vmatpush.bf16.msra.mxu0 %v1039
        %1313 = vmatpush.bf16.msra.mxu0 %v1035
        %1314 = vmatpush.bf16.msra.mxu0 %v1031
        %1315 = vmatpush.bf16.msra.mxu0 %v1027
        %1316 = vmatpush.bf16.msra.mxu0 %v1023
        %1317 = vmatpush.bf16.msra.mxu0 %v1019
        %1318 = vmatpush.bf16.msra.mxu0 %v1015
        %1319 = vmatpush.bf16.msra.mxu0 %v1011
        %1320 = vmatmul.bf16.gmra.mxu0 %v524
        %v1321 = vpop.f32.mrf.mxu0
        %v1322 = vadd.f32 %v1309, %v1321
        %v1323 = vpop.f32.mrf.mxu0
        %1324 = vdwg.mxu0
        %1325 = vmatpush.bf16.msra.mxu0 %v944
        %1326 = vmatpush.bf16.msra.mxu0 %v940
        %1327 = vmatpush.bf16.msra.mxu0 %v936
        %1328 = vmatpush.bf16.msra.mxu0 %v932
        %1329 = vmatpush.bf16.msra.mxu0 %v928
        %1330 = vmatpush.bf16.msra.mxu0 %v924
        %1331 = vmatpush.bf16.msra.mxu0 %v920
        %1332 = vmatpush.bf16.msra.mxu0 %v916
        %1333 = vmatmul.bf16.gmra.mxu0 %v521
        %v1334 = vpop.f32.mrf.mxu0
        %v1335 = vadd.f32 0.0, %v1334
        %v1336 = vpop.f32.mrf.mxu0
        %1337 = vdwg.mxu0
        %1338 = vmatpush.bf16.msra.mxu0 %v976
        %1339 = vmatpush.bf16.msra.mxu0 %v972
        %1340 = vmatpush.bf16.msra.mxu0 %v968
        %1341 = vmatpush.bf16.msra.mxu0 %v964
        %1342 = vmatpush.bf16.msra.mxu0 %v960
        %1343 = vmatpush.bf16.msra.mxu0 %v956
        %1344 = vmatpush.bf16.msra.mxu0 %v952
        %1345 = vmatpush.bf16.msra.mxu0 %v948
        %1346 = vmatmul.bf16.gmra.mxu0 %v522
        %v1347 = vpop.f32.mrf.mxu0
        %v1348 = vadd.f32 %v1335, %v1347
        %v1349 = vpop.f32.mrf.mxu0
        %1350 = vdwg.mxu0
        %1351 = vmatpush.bf16.msra.mxu0 %v1008
        %1352 = vmatpush.bf16.msra.mxu0 %v1004
        %1353 = vmatpush.bf16.msra.mxu0 %v1000
        %1354 = vmatpush.bf16.msra.mxu0 %v996
        %1355 = vmatpush.bf16.msra.mxu0 %v992
        %1356 = vmatpush.bf16.msra.mxu0 %v988
        %1357 = vmatpush.bf16.msra.mxu0 %v984
        %1358 = vmatpush.bf16.msra.mxu0 %v980
        %1359 = vmatmul.bf16.gmra.mxu0 %v523
        %v1360 = vpop.f32.mrf.mxu0
        %v1361 = vadd.f32 %v1348, %v1360
        %v1362 = vpop.f32.mrf.mxu0
        %1363 = vdwg.mxu0
        %1364 = vmatpush.bf16.msra.mxu0 %v1040
        %1365 = vmatpush.bf16.msra.mxu0 %v1036
        %1366 = vmatpush.bf16.msra.mxu0 %v1032
        %1367 = vmatpush.bf16.msra.mxu0 %v1028
        %1368 = vmatpush.bf16.msra.mxu0 %v1024
        %1369 = vmatpush.bf16.msra.mxu0 %v1020
        %1370 = vmatpush.bf16.msra.mxu0 %v1016
        %1371 = vmatpush.bf16.msra.mxu0 %v1012
        %1372 = vmatmul.bf16.gmra.mxu0 %v524
        %v1373 = vpop.f32.mrf.mxu0
        %v1374 = vadd.f32 %v1361, %v1373
        %v1375 = vpop.f32.mrf.mxu0
        %1376 = vdwg.mxu0
        %v1377 = vadd.f32 %v383, %v1218
        %v1378 = vadd.f32 %v384, %v1270
        %v1379 = vadd.f32 %v385, %v1322
        %v1380 = vadd.f32 %v386, %v1374
        %1381 = vst [vmem:[#allocation2] sm:$0xff] %v1377
        %1382 = vst [vmem:[#allocation2 + $0x8] sm:$0xff] %v1378
        %1383 = vst [vmem:[#allocation2 + $0x10] sm:$0xff] %v1379
        %1384 = vst [vmem:[#allocation2 + $0x18] sm:$0xff] %v1380
        %v1385 = vld [vmem:[#allocation3] sm:$0xff]
        %v1386 = vld [vmem:[#allocation3 + $0x8] sm:$0xff]
        %v1387 = vld [vmem:[#allocation3 + $0x10] sm:$0xff]
        %v1388 = vld [vmem:[#allocation3 + $0x18] sm:$0xff]
        %v1389 = vld [vmem:[%s298] sm:$0xff]
        %v1390 = vld [vmem:[%s298 + $0x8] sm:$0xff]
        %v1391 = vld [vmem:[%s298 + $0x10] sm:$0xff]
        %v1392 = vld [vmem:[%s298 + $0x18] sm:$0xff]
        %v1393 = vld [vmem:[%s298 + $0x20] sm:$0xff]
        %v1394 = vld [vmem:[%s298 + $0x28] sm:$0xff]
        %v1395 = vld [vmem:[%s298 + $0x30] sm:$0xff]
        %v1396 = vld [vmem:[%s298 + $0x38] sm:$0xff]
        %v1397 = vld [vmem:[%s298 + $0x40] sm:$0xff]
        %v1398 = vld [vmem:[%s298 + $0x48] sm:$0xff]
        %v1399 = vld [vmem:[%s298 + $0x50] sm:$0xff]
        %v1400 = vld [vmem:[%s298 + $0x58] sm:$0xff]
        %v1401 = vld [vmem:[%s298 + $0x60] sm:$0xff]
        %v1402 = vld [vmem:[%s298 + $0x68] sm:$0xff]
        %v1403 = vld [vmem:[%s298 + $0x70] sm:$0xff]
        %v1404 = vld [vmem:[%s298 + $0x78] sm:$0xff]
        %v1405 = vld [vmem:[%s298 + $0x80] sm:$0xff]
        %v1406 = vld [vmem:[%s298 + $0x88] sm:$0xff]
        %v1407 = vld [vmem:[%s298 + $0x90] sm:$0xff]
        %v1408 = vld [vmem:[%s298 + $0x98] sm:$0xff]
        %v1409 = vld [vmem:[%s298 + $0xa0] sm:$0xff]
        %v1410 = vld [vmem:[%s298 + $0xa8] sm:$0xff]
        %v1411 = vld [vmem:[%s298 + $0xb0] sm:$0xff]
        %v1412 = vld [vmem:[%s298 + $0xb8] sm:$0xff]
        %v1413 = vld [vmem:[%s298 + $0xc0] sm:$0xff]
        %v1414 = vld [vmem:[%s298 + $0xc8] sm:$0xff]
        %v1415 = vld [vmem:[%s298 + $0xd0] sm:$0xff]
        %v1416 = vld [vmem:[%s298 + $0xd8] sm:$0xff]
        %v1417 = vld [vmem:[%s298 + $0xe0] sm:$0xff]
        %v1418 = vld [vmem:[%s298 + $0xe8] sm:$0xff]
        %v1419 = vld [vmem:[%s298 + $0xf0] sm:$0xff]
        %v1420 = vld [vmem:[%s298 + $0xf8] sm:$0xff]
        %v1421 = vld [vmem:[%s298 + $0x100] sm:$0xff]
        %v1422 = vld [vmem:[%s298 + $0x108] sm:$0xff]
        %v1423 = vld [vmem:[%s298 + $0x110] sm:$0xff]
        %v1424 = vld [vmem:[%s298 + $0x118] sm:$0xff]
        %v1425 = vld [vmem:[%s298 + $0x120] sm:$0xff]
        %v1426 = vld [vmem:[%s298 + $0x128] sm:$0xff]
        %v1427 = vld [vmem:[%s298 + $0x130] sm:$0xff]
        %v1428 = vld [vmem:[%s298 + $0x138] sm:$0xff]
        %v1429 = vld [vmem:[%s298 + $0x140] sm:$0xff]
        %v1430 = vld [vmem:[%s298 + $0x148] sm:$0xff]
        %v1431 = vld [vmem:[%s298 + $0x150] sm:$0xff]
        %v1432 = vld [vmem:[%s298 + $0x158] sm:$0xff]
        %v1433 = vld [vmem:[%s298 + $0x160] sm:$0xff]
        %v1434 = vld [vmem:[%s298 + $0x168] sm:$0xff]
        %v1435 = vld [vmem:[%s298 + $0x170] sm:$0xff]
        %v1436 = vld [vmem:[%s298 + $0x178] sm:$0xff]
        %v1437 = vld [vmem:[%s298 + $0x180] sm:$0xff]
        %v1438 = vld [vmem:[%s298 + $0x188] sm:$0xff]
        %v1439 = vld [vmem:[%s298 + $0x190] sm:$0xff]
        %v1440 = vld [vmem:[%s298 + $0x198] sm:$0xff]
        %v1441 = vld [vmem:[%s298 + $0x1a0] sm:$0xff]
        %v1442 = vld [vmem:[%s298 + $0x1a8] sm:$0xff]
        %v1443 = vld [vmem:[%s298 + $0x1b0] sm:$0xff]
        %v1444 = vld [vmem:[%s298 + $0x1b8] sm:$0xff]
        %v1445 = vld [vmem:[%s298 + $0x1c0] sm:$0xff]
        %v1446 = vld [vmem:[%s298 + $0x1c8] sm:$0xff]
        %v1447 = vld [vmem:[%s298 + $0x1d0] sm:$0xff]
        %v1448 = vld [vmem:[%s298 + $0x1d8] sm:$0xff]
        %v1449 = vld [vmem:[%s298 + $0x1e0] sm:$0xff]
        %v1450 = vld [vmem:[%s298 + $0x1e8] sm:$0xff]
        %v1451 = vld [vmem:[%s298 + $0x1f0] sm:$0xff]
        %v1452 = vld [vmem:[%s298 + $0x1f8] sm:$0xff]
        %v1453 = vld [vmem:[%s298 + $0x200] sm:$0xff]
        %v1454 = vld [vmem:[%s298 + $0x208] sm:$0xff]
        %v1455 = vld [vmem:[%s298 + $0x210] sm:$0xff]
        %v1456 = vld [vmem:[%s298 + $0x218] sm:$0xff]
        %v1457 = vld [vmem:[%s298 + $0x220] sm:$0xff]
        %v1458 = vld [vmem:[%s298 + $0x228] sm:$0xff]
        %v1459 = vld [vmem:[%s298 + $0x230] sm:$0xff]
        %v1460 = vld [vmem:[%s298 + $0x238] sm:$0xff]
        %v1461 = vld [vmem:[%s298 + $0x240] sm:$0xff]
        %v1462 = vld [vmem:[%s298 + $0x248] sm:$0xff]
        %v1463 = vld [vmem:[%s298 + $0x250] sm:$0xff]
        %v1464 = vld [vmem:[%s298 + $0x258] sm:$0xff]
        %v1465 = vld [vmem:[%s298 + $0x260] sm:$0xff]
        %v1466 = vld [vmem:[%s298 + $0x268] sm:$0xff]
        %v1467 = vld [vmem:[%s298 + $0x270] sm:$0xff]
        %v1468 = vld [vmem:[%s298 + $0x278] sm:$0xff]
        %v1469 = vld [vmem:[%s298 + $0x280] sm:$0xff]
        %v1470 = vld [vmem:[%s298 + $0x288] sm:$0xff]
        %v1471 = vld [vmem:[%s298 + $0x290] sm:$0xff]
        %v1472 = vld [vmem:[%s298 + $0x298] sm:$0xff]
        %v1473 = vld [vmem:[%s298 + $0x2a0] sm:$0xff]
        %v1474 = vld [vmem:[%s298 + $0x2a8] sm:$0xff]
        %v1475 = vld [vmem:[%s298 + $0x2b0] sm:$0xff]
        %v1476 = vld [vmem:[%s298 + $0x2b8] sm:$0xff]
        %v1477 = vld [vmem:[%s298 + $0x2c0] sm:$0xff]
        %v1478 = vld [vmem:[%s298 + $0x2c8] sm:$0xff]
        %v1479 = vld [vmem:[%s298 + $0x2d0] sm:$0xff]
        %v1480 = vld [vmem:[%s298 + $0x2d8] sm:$0xff]
        %v1481 = vld [vmem:[%s298 + $0x2e0] sm:$0xff]
        %v1482 = vld [vmem:[%s298 + $0x2e8] sm:$0xff]
        %v1483 = vld [vmem:[%s298 + $0x2f0] sm:$0xff]
        %v1484 = vld [vmem:[%s298 + $0x2f8] sm:$0xff]
        %v1485 = vld [vmem:[%s298 + $0x300] sm:$0xff]
        %v1486 = vld [vmem:[%s298 + $0x308] sm:$0xff]
        %v1487 = vld [vmem:[%s298 + $0x310] sm:$0xff]
        %v1488 = vld [vmem:[%s298 + $0x318] sm:$0xff]
        %v1489 = vld [vmem:[%s298 + $0x320] sm:$0xff]
        %v1490 = vld [vmem:[%s298 + $0x328] sm:$0xff]
        %v1491 = vld [vmem:[%s298 + $0x330] sm:$0xff]
        %v1492 = vld [vmem:[%s298 + $0x338] sm:$0xff]
        %v1493 = vld [vmem:[%s298 + $0x340] sm:$0xff]
        %v1494 = vld [vmem:[%s298 + $0x348] sm:$0xff]
        %v1495 = vld [vmem:[%s298 + $0x350] sm:$0xff]
        %v1496 = vld [vmem:[%s298 + $0x358] sm:$0xff]
        %v1497 = vld [vmem:[%s298 + $0x360] sm:$0xff]
        %v1498 = vld [vmem:[%s298 + $0x368] sm:$0xff]
        %v1499 = vld [vmem:[%s298 + $0x370] sm:$0xff]
        %v1500 = vld [vmem:[%s298 + $0x378] sm:$0xff]
        %v1501 = vld [vmem:[%s298 + $0x380] sm:$0xff]
        %v1502 = vld [vmem:[%s298 + $0x388] sm:$0xff]
        %v1503 = vld [vmem:[%s298 + $0x390] sm:$0xff]
        %v1504 = vld [vmem:[%s298 + $0x398] sm:$0xff]
        %v1505 = vld [vmem:[%s298 + $0x3a0] sm:$0xff]
        %v1506 = vld [vmem:[%s298 + $0x3a8] sm:$0xff]
        %v1507 = vld [vmem:[%s298 + $0x3b0] sm:$0xff]
        %v1508 = vld [vmem:[%s298 + $0x3b8] sm:$0xff]
        %v1509 = vld [vmem:[%s298 + $0x3c0] sm:$0xff]
        %v1510 = vld [vmem:[%s298 + $0x3c8] sm:$0xff]
        %v1511 = vld [vmem:[%s298 + $0x3d0] sm:$0xff]
        %v1512 = vld [vmem:[%s298 + $0x3d8] sm:$0xff]
        %v1513 = vld [vmem:[%s298 + $0x3e0] sm:$0xff]
        %v1514 = vld [vmem:[%s298 + $0x3e8] sm:$0xff]
        %v1515 = vld [vmem:[%s298 + $0x3f0] sm:$0xff]
        %v1516 = vld [vmem:[%s298 + $0x3f8] sm:$0xff]
        %v1645 = vunpack.c.l.b16 %v1389
        %v1646 = vunpack.c.h.b16 %v1389
        %v1647 = vunpack.c.l.b16 %v1390
        %v1648 = vunpack.c.h.b16 %v1390
        %v1649 = vunpack.c.l.b16 %v1391
        %v1650 = vunpack.c.h.b16 %v1391
        %v1651 = vunpack.c.l.b16 %v1392
        %v1652 = vunpack.c.h.b16 %v1392
        %v1653 = vunpack.c.l.b16 %v1393
        %v1654 = vunpack.c.h.b16 %v1393
        %v1655 = vunpack.c.l.b16 %v1394
        %v1656 = vunpack.c.h.b16 %v1394
        %v1657 = vunpack.c.l.b16 %v1395
        %v1658 = vunpack.c.h.b16 %v1395
        %v1659 = vunpack.c.l.b16 %v1396
        %v1660 = vunpack.c.h.b16 %v1396
        %v1661 = vunpack.c.l.b16 %v1397
        %v1662 = vunpack.c.h.b16 %v1397
        %v1663 = vunpack.c.l.b16 %v1398
        %v1664 = vunpack.c.h.b16 %v1398
        %v1665 = vunpack.c.l.b16 %v1399
        %v1666 = vunpack.c.h.b16 %v1399
        %v1667 = vunpack.c.l.b16 %v1400
        %v1668 = vunpack.c.h.b16 %v1400
        %v1669 = vunpack.c.l.b16 %v1401
        %v1670 = vunpack.c.h.b16 %v1401
        %v1671 = vunpack.c.l.b16 %v1402
        %v1672 = vunpack.c.h.b16 %v1402
        %v1673 = vunpack.c.l.b16 %v1403
        %v1674 = vunpack.c.h.b16 %v1403
        %v1675 = vunpack.c.l.b16 %v1404
        %v1676 = vunpack.c.h.b16 %v1404
        %v1677 = vunpack.c.l.b16 %v1405
        %v1678 = vunpack.c.h.b16 %v1405
        %v1679 = vunpack.c.l.b16 %v1406
        %v1680 = vunpack.c.h.b16 %v1406
        %v1681 = vunpack.c.l.b16 %v1407
        %v1682 = vunpack.c.h.b16 %v1407
        %v1683 = vunpack.c.l.b16 %v1408
        %v1684 = vunpack.c.h.b16 %v1408
        %v1685 = vunpack.c.l.b16 %v1409
        %v1686 = vunpack.c.h.b16 %v1409
        %v1687 = vunpack.c.l.b16 %v1410
        %v1688 = vunpack.c.h.b16 %v1410
        %v1689 = vunpack.c.l.b16 %v1411
        %v1690 = vunpack.c.h.b16 %v1411
        %v1691 = vunpack.c.l.b16 %v1412
        %v1692 = vunpack.c.h.b16 %v1412
        %v1693 = vunpack.c.l.b16 %v1413
        %v1694 = vunpack.c.h.b16 %v1413
        %v1695 = vunpack.c.l.b16 %v1414
        %v1696 = vunpack.c.h.b16 %v1414
        %v1697 = vunpack.c.l.b16 %v1415
        %v1698 = vunpack.c.h.b16 %v1415
        %v1699 = vunpack.c.l.b16 %v1416
        %v1700 = vunpack.c.h.b16 %v1416
        %v1701 = vunpack.c.l.b16 %v1417
        %v1702 = vunpack.c.h.b16 %v1417
        %v1703 = vunpack.c.l.b16 %v1418
        %v1704 = vunpack.c.h.b16 %v1418
        %v1705 = vunpack.c.l.b16 %v1419
        %v1706 = vunpack.c.h.b16 %v1419
        %v1707 = vunpack.c.l.b16 %v1420
        %v1708 = vunpack.c.h.b16 %v1420
        %v1709 = vunpack.c.l.b16 %v1421
        %v1710 = vunpack.c.h.b16 %v1421
        %v1711 = vunpack.c.l.b16 %v1422
        %v1712 = vunpack.c.h.b16 %v1422
        %v1713 = vunpack.c.l.b16 %v1423
        %v1714 = vunpack.c.h.b16 %v1423
        %v1715 = vunpack.c.l.b16 %v1424
        %v1716 = vunpack.c.h.b16 %v1424
        %v1717 = vunpack.c.l.b16 %v1425
        %v1718 = vunpack.c.h.b16 %v1425
        %v1719 = vunpack.c.l.b16 %v1426
        %v1720 = vunpack.c.h.b16 %v1426
        %v1721 = vunpack.c.l.b16 %v1427
        %v1722 = vunpack.c.h.b16 %v1427
        %v1723 = vunpack.c.l.b16 %v1428
        %v1724 = vunpack.c.h.b16 %v1428
        %v1725 = vunpack.c.l.b16 %v1429
        %v1726 = vunpack.c.h.b16 %v1429
        %v1727 = vunpack.c.l.b16 %v1430
        %v1728 = vunpack.c.h.b16 %v1430
        %v1729 = vunpack.c.l.b16 %v1431
        %v1730 = vunpack.c.h.b16 %v1431
        %v1731 = vunpack.c.l.b16 %v1432
        %v1732 = vunpack.c.h.b16 %v1432
        %v1733 = vunpack.c.l.b16 %v1433
        %v1734 = vunpack.c.h.b16 %v1433
        %v1735 = vunpack.c.l.b16 %v1434
        %v1736 = vunpack.c.h.b16 %v1434
        %v1737 = vunpack.c.l.b16 %v1435
        %v1738 = vunpack.c.h.b16 %v1435
        %v1739 = vunpack.c.l.b16 %v1436
        %v1740 = vunpack.c.h.b16 %v1436
        %v1741 = vunpack.c.l.b16 %v1437
        %v1742 = vunpack.c.h.b16 %v1437
        %v1743 = vunpack.c.l.b16 %v1438
        %v1744 = vunpack.c.h.b16 %v1438
        %v1745 = vunpack.c.l.b16 %v1439
        %v1746 = vunpack.c.h.b16 %v1439
        %v1747 = vunpack.c.l.b16 %v1440
        %v1748 = vunpack.c.h.b16 %v1440
        %v1749 = vunpack.c.l.b16 %v1441
        %v1750 = vunpack.c.h.b16 %v1441
        %v1751 = vunpack.c.l.b16 %v1442
        %v1752 = vunpack.c.h.b16 %v1442
        %v1753 = vunpack.c.l.b16 %v1443
        %v1754 = vunpack.c.h.b16 %v1443
        %v1755 = vunpack.c.l.b16 %v1444
        %v1756 = vunpack.c.h.b16 %v1444
        %v1757 = vunpack.c.l.b16 %v1445
        %v1758 = vunpack.c.h.b16 %v1445
        %v1759 = vunpack.c.l.b16 %v1446
        %v1760 = vunpack.c.h.b16 %v1446
        %v1761 = vunpack.c.l.b16 %v1447
        %v1762 = vunpack.c.h.b16 %v1447
        %v1763 = vunpack.c.l.b16 %v1448
        %v1764 = vunpack.c.h.b16 %v1448
        %v1765 = vunpack.c.l.b16 %v1449
        %v1766 = vunpack.c.h.b16 %v1449
        %v1767 = vunpack.c.l.b16 %v1450
        %v1768 = vunpack.c.h.b16 %v1450
        %v1769 = vunpack.c.l.b16 %v1451
        %v1770 = vunpack.c.h.b16 %v1451
        %v1771 = vunpack.c.l.b16 %v1452
        %v1772 = vunpack.c.h.b16 %v1452
        %v1773 = vunpack.c.l.b16 %v1453
        %v1774 = vunpack.c.h.b16 %v1453
        %v1775 = vunpack.c.l.b16 %v1454
        %v1776 = vunpack.c.h.b16 %v1454
        %v1777 = vunpack.c.l.b16 %v1455
        %v1778 = vunpack.c.h.b16 %v1455
        %v1779 = vunpack.c.l.b16 %v1456
        %v1780 = vunpack.c.h.b16 %v1456
        %v1781 = vunpack.c.l.b16 %v1457
        %v1782 = vunpack.c.h.b16 %v1457
        %v1783 = vunpack.c.l.b16 %v1458
        %v1784 = vunpack.c.h.b16 %v1458
        %v1785 = vunpack.c.l.b16 %v1459
        %v1786 = vunpack.c.h.b16 %v1459
        %v1787 = vunpack.c.l.b16 %v1460
        %v1788 = vunpack.c.h.b16 %v1460
        %v1789 = vunpack.c.l.b16 %v1461
        %v1790 = vunpack.c.h.b16 %v1461
        %v1791 = vunpack.c.l.b16 %v1462
        %v1792 = vunpack.c.h.b16 %v1462
        %v1793 = vunpack.c.l.b16 %v1463
        %v1794 = vunpack.c.h.b16 %v1463
        %v1795 = vunpack.c.l.b16 %v1464
        %v1796 = vunpack.c.h.b16 %v1464
        %v1797 = vunpack.c.l.b16 %v1465
        %v1798 = vunpack.c.h.b16 %v1465
        %v1799 = vunpack.c.l.b16 %v1466
        %v1800 = vunpack.c.h.b16 %v1466
        %v1801 = vunpack.c.l.b16 %v1467
        %v1802 = vunpack.c.h.b16 %v1467
        %v1803 = vunpack.c.l.b16 %v1468
        %v1804 = vunpack.c.h.b16 %v1468
        %v1805 = vunpack.c.l.b16 %v1469
        %v1806 = vunpack.c.h.b16 %v1469
        %v1807 = vunpack.c.l.b16 %v1470
        %v1808 = vunpack.c.h.b16 %v1470
        %v1809 = vunpack.c.l.b16 %v1471
        %v1810 = vunpack.c.h.b16 %v1471
        %v1811 = vunpack.c.l.b16 %v1472
        %v1812 = vunpack.c.h.b16 %v1472
        %v1813 = vunpack.c.l.b16 %v1473
        %v1814 = vunpack.c.h.b16 %v1473
        %v1815 = vunpack.c.l.b16 %v1474
        %v1816 = vunpack.c.h.b16 %v1474
        %v1817 = vunpack.c.l.b16 %v1475
        %v1818 = vunpack.c.h.b16 %v1475
        %v1819 = vunpack.c.l.b16 %v1476
        %v1820 = vunpack.c.h.b16 %v1476
        %v1821 = vunpack.c.l.b16 %v1477
        %v1822 = vunpack.c.h.b16 %v1477
        %v1823 = vunpack.c.l.b16 %v1478
        %v1824 = vunpack.c.h.b16 %v1478
        %v1825 = vunpack.c.l.b16 %v1479
        %v1826 = vunpack.c.h.b16 %v1479
        %v1827 = vunpack.c.l.b16 %v1480
        %v1828 = vunpack.c.h.b16 %v1480
        %v1829 = vunpack.c.l.b16 %v1481
        %v1830 = vunpack.c.h.b16 %v1481
        %v1831 = vunpack.c.l.b16 %v1482
        %v1832 = vunpack.c.h.b16 %v1482
        %v1833 = vunpack.c.l.b16 %v1483
        %v1834 = vunpack.c.h.b16 %v1483
        %v1835 = vunpack.c.l.b16 %v1484
        %v1836 = vunpack.c.h.b16 %v1484
        %v1837 = vunpack.c.l.b16 %v1485
        %v1838 = vunpack.c.h.b16 %v1485
        %v1839 = vunpack.c.l.b16 %v1486
        %v1840 = vunpack.c.h.b16 %v1486
        %v1841 = vunpack.c.l.b16 %v1487
        %v1842 = vunpack.c.h.b16 %v1487
        %v1843 = vunpack.c.l.b16 %v1488
        %v1844 = vunpack.c.h.b16 %v1488
        %v1845 = vunpack.c.l.b16 %v1489
        %v1846 = vunpack.c.h.b16 %v1489
        %v1847 = vunpack.c.l.b16 %v1490
        %v1848 = vunpack.c.h.b16 %v1490
        %v1849 = vunpack.c.l.b16 %v1491
        %v1850 = vunpack.c.h.b16 %v1491
        %v1851 = vunpack.c.l.b16 %v1492
        %v1852 = vunpack.c.h.b16 %v1492
        %v1853 = vunpack.c.l.b16 %v1493
        %v1854 = vunpack.c.h.b16 %v1493
        %v1855 = vunpack.c.l.b16 %v1494
        %v1856 = vunpack.c.h.b16 %v1494
        %v1857 = vunpack.c.l.b16 %v1495
        %v1858 = vunpack.c.h.b16 %v1495
        %v1859 = vunpack.c.l.b16 %v1496
        %v1860 = vunpack.c.h.b16 %v1496
        %v1861 = vunpack.c.l.b16 %v1497
        %v1862 = vunpack.c.h.b16 %v1497
        %v1863 = vunpack.c.l.b16 %v1498
        %v1864 = vunpack.c.h.b16 %v1498
        %v1865 = vunpack.c.l.b16 %v1499
        %v1866 = vunpack.c.h.b16 %v1499
        %v1867 = vunpack.c.l.b16 %v1500
        %v1868 = vunpack.c.h.b16 %v1500
        %v1869 = vunpack.c.l.b16 %v1501
        %v1870 = vunpack.c.h.b16 %v1501
        %v1871 = vunpack.c.l.b16 %v1502
        %v1872 = vunpack.c.h.b16 %v1502
        %v1873 = vunpack.c.l.b16 %v1503
        %v1874 = vunpack.c.h.b16 %v1503
        %v1875 = vunpack.c.l.b16 %v1504
        %v1876 = vunpack.c.h.b16 %v1504
        %v1877 = vunpack.c.l.b16 %v1505
        %v1878 = vunpack.c.h.b16 %v1505
        %v1879 = vunpack.c.l.b16 %v1506
        %v1880 = vunpack.c.h.b16 %v1506
        %v1881 = vunpack.c.l.b16 %v1507
        %v1882 = vunpack.c.h.b16 %v1507
        %v1883 = vunpack.c.l.b16 %v1508
        %v1884 = vunpack.c.h.b16 %v1508
        %v1885 = vunpack.c.l.b16 %v1509
        %v1886 = vunpack.c.h.b16 %v1509
        %v1887 = vunpack.c.l.b16 %v1510
        %v1888 = vunpack.c.h.b16 %v1510
        %v1889 = vunpack.c.l.b16 %v1511
        %v1890 = vunpack.c.h.b16 %v1511
        %v1891 = vunpack.c.l.b16 %v1512
        %v1892 = vunpack.c.h.b16 %v1512
        %v1893 = vunpack.c.l.b16 %v1513
        %v1894 = vunpack.c.h.b16 %v1513
        %v1895 = vunpack.c.l.b16 %v1514
        %v1896 = vunpack.c.h.b16 %v1514
        %v1897 = vunpack.c.l.b16 %v1515
        %v1898 = vunpack.c.h.b16 %v1515
        %v1899 = vunpack.c.l.b16 %v1516
        %v1900 = vunpack.c.h.b16 %v1516
        %v1901 = vpack.c.b16 %v1649, %v1645
        %v1902 = vpack.c.b16 %v1650, %v1646
        %v1903 = vpack.c.b16 %v1651, %v1647
        %v1904 = vpack.c.b16 %v1652, %v1648
        %v1905 = vpack.c.b16 %v1657, %v1653
        %v1906 = vpack.c.b16 %v1658, %v1654
        %v1907 = vpack.c.b16 %v1659, %v1655
        %v1908 = vpack.c.b16 %v1660, %v1656
        %v1909 = vpack.c.b16 %v1665, %v1661
        %v1910 = vpack.c.b16 %v1666, %v1662
        %v1911 = vpack.c.b16 %v1667, %v1663
        %v1912 = vpack.c.b16 %v1668, %v1664
        %v1913 = vpack.c.b16 %v1673, %v1669
        %v1914 = vpack.c.b16 %v1674, %v1670
        %v1915 = vpack.c.b16 %v1675, %v1671
        %v1916 = vpack.c.b16 %v1676, %v1672
        %v1917 = vpack.c.b16 %v1681, %v1677
        %v1918 = vpack.c.b16 %v1682, %v1678
        %v1919 = vpack.c.b16 %v1683, %v1679
        %v1920 = vpack.c.b16 %v1684, %v1680
        %v1921 = vpack.c.b16 %v1689, %v1685
        %v1922 = vpack.c.b16 %v1690, %v1686
        %v1923 = vpack.c.b16 %v1691, %v1687
        %v1924 = vpack.c.b16 %v1692, %v1688
        %v1925 = vpack.c.b16 %v1697, %v1693
        %v1926 = vpack.c.b16 %v1698, %v1694
        %v1927 = vpack.c.b16 %v1699, %v1695
        %v1928 = vpack.c.b16 %v1700, %v1696
        %v1929 = vpack.c.b16 %v1705, %v1701
        %v1930 = vpack.c.b16 %v1706, %v1702
        %v1931 = vpack.c.b16 %v1707, %v1703
        %v1932 = vpack.c.b16 %v1708, %v1704
        %v1933 = vpack.c.b16 %v1713, %v1709
        %v1934 = vpack.c.b16 %v1714, %v1710
        %v1935 = vpack.c.b16 %v1715, %v1711
        %v1936 = vpack.c.b16 %v1716, %v1712
        %v1937 = vpack.c.b16 %v1721, %v1717
        %v1938 = vpack.c.b16 %v1722, %v1718
        %v1939 = vpack.c.b16 %v1723, %v1719
        %v1940 = vpack.c.b16 %v1724, %v1720
        %v1941 = vpack.c.b16 %v1729, %v1725
        %v1942 = vpack.c.b16 %v1730, %v1726
        %v1943 = vpack.c.b16 %v1731, %v1727
        %v1944 = vpack.c.b16 %v1732, %v1728
        %v1945 = vpack.c.b16 %v1737, %v1733
        %v1946 = vpack.c.b16 %v1738, %v1734
        %v1947 = vpack.c.b16 %v1739, %v1735
        %v1948 = vpack.c.b16 %v1740, %v1736
        %v1949 = vpack.c.b16 %v1745, %v1741
        %v1950 = vpack.c.b16 %v1746, %v1742
        %v1951 = vpack.c.b16 %v1747, %v1743
        %v1952 = vpack.c.b16 %v1748, %v1744
        %v1953 = vpack.c.b16 %v1753, %v1749
        %v1954 = vpack.c.b16 %v1754, %v1750
        %v1955 = vpack.c.b16 %v1755, %v1751
        %v1956 = vpack.c.b16 %v1756, %v1752
        %v1957 = vpack.c.b16 %v1761, %v1757
        %v1958 = vpack.c.b16 %v1762, %v1758
        %v1959 = vpack.c.b16 %v1763, %v1759
        %v1960 = vpack.c.b16 %v1764, %v1760
        %v1961 = vpack.c.b16 %v1769, %v1765
        %v1962 = vpack.c.b16 %v1770, %v1766
        %v1963 = vpack.c.b16 %v1771, %v1767
        %v1964 = vpack.c.b16 %v1772, %v1768
        %v1965 = vpack.c.b16 %v1777, %v1773
        %v1966 = vpack.c.b16 %v1778, %v1774
        %v1967 = vpack.c.b16 %v1779, %v1775
        %v1968 = vpack.c.b16 %v1780, %v1776
        %v1969 = vpack.c.b16 %v1785, %v1781
        %v1970 = vpack.c.b16 %v1786, %v1782
        %v1971 = vpack.c.b16 %v1787, %v1783
        %v1972 = vpack.c.b16 %v1788, %v1784
        %v1973 = vpack.c.b16 %v1793, %v1789
        %v1974 = vpack.c.b16 %v1794, %v1790
        %v1975 = vpack.c.b16 %v1795, %v1791
        %v1976 = vpack.c.b16 %v1796, %v1792
        %v1977 = vpack.c.b16 %v1801, %v1797
        %v1978 = vpack.c.b16 %v1802, %v1798
        %v1979 = vpack.c.b16 %v1803, %v1799
        %v1980 = vpack.c.b16 %v1804, %v1800
        %v1981 = vpack.c.b16 %v1809, %v1805
        %v1982 = vpack.c.b16 %v1810, %v1806
        %v1983 = vpack.c.b16 %v1811, %v1807
        %v1984 = vpack.c.b16 %v1812, %v1808
        %v1985 = vpack.c.b16 %v1817, %v1813
        %v1986 = vpack.c.b16 %v1818, %v1814
        %v1987 = vpack.c.b16 %v1819, %v1815
        %v1988 = vpack.c.b16 %v1820, %v1816
        %v1989 = vpack.c.b16 %v1825, %v1821
        %v1990 = vpack.c.b16 %v1826, %v1822
        %v1991 = vpack.c.b16 %v1827, %v1823
        %v1992 = vpack.c.b16 %v1828, %v1824
        %v1993 = vpack.c.b16 %v1833, %v1829
        %v1994 = vpack.c.b16 %v1834, %v1830
        %v1995 = vpack.c.b16 %v1835, %v1831
        %v1996 = vpack.c.b16 %v1836, %v1832
        %v1997 = vpack.c.b16 %v1841, %v1837
        %v1998 = vpack.c.b16 %v1842, %v1838
        %v1999 = vpack.c.b16 %v1843, %v1839
        %v2000 = vpack.c.b16 %v1844, %v1840
        %v2001 = vpack.c.b16 %v1849, %v1845
        %v2002 = vpack.c.b16 %v1850, %v1846
        %v2003 = vpack.c.b16 %v1851, %v1847
        %v2004 = vpack.c.b16 %v1852, %v1848
        %v2005 = vpack.c.b16 %v1857, %v1853
        %v2006 = vpack.c.b16 %v1858, %v1854
        %v2007 = vpack.c.b16 %v1859, %v1855
        %v2008 = vpack.c.b16 %v1860, %v1856
        %v2009 = vpack.c.b16 %v1865, %v1861
        %v2010 = vpack.c.b16 %v1866, %v1862
        %v2011 = vpack.c.b16 %v1867, %v1863
        %v2012 = vpack.c.b16 %v1868, %v1864
        %v2013 = vpack.c.b16 %v1873, %v1869
        %v2014 = vpack.c.b16 %v1874, %v1870
        %v2015 = vpack.c.b16 %v1875, %v1871
        %v2016 = vpack.c.b16 %v1876, %v1872
        %v2017 = vpack.c.b16 %v1881, %v1877
        %v2018 = vpack.c.b16 %v1882, %v1878
        %v2019 = vpack.c.b16 %v1883, %v1879
        %v2020 = vpack.c.b16 %v1884, %v1880
        %v2021 = vpack.c.b16 %v1889, %v1885
        %v2022 = vpack.c.b16 %v1890, %v1886
        %v2023 = vpack.c.b16 %v1891, %v1887
        %v2024 = vpack.c.b16 %v1892, %v1888
        %v2025 = vpack.c.b16 %v1897, %v1893
        %v2026 = vpack.c.b16 %v1898, %v1894
        %v2027 = vpack.c.b16 %v1899, %v1895
        %v2028 = vpack.c.b16 %v1900, %v1896
        %2157 = vmatpush.bf16.msra.mxu0 %v1929
        %2158 = vmatpush.bf16.msra.mxu0 %v1925
        %2159 = vmatpush.bf16.msra.mxu0 %v1921
        %2160 = vmatpush.bf16.msra.mxu0 %v1917
        %2161 = vmatpush.bf16.msra.mxu0 %v1913
        %2162 = vmatpush.bf16.msra.mxu0 %v1909
        %2163 = vmatpush.bf16.msra.mxu0 %v1905
        %2164 = vmatpush.bf16.msra.mxu0 %v1901
        %2165 = vmatmul.bf16.gmra.mxu0 %v521
        %v2166 = vpop.f32.mrf.mxu0
        %v2167 = vadd.f32 0.0, %v2166
        %v2168 = vpop.f32.mrf.mxu0
        %2169 = vdwg.mxu0
        %2170 = vmatpush.bf16.msra.mxu0 %v1961
        %2171 = vmatpush.bf16.msra.mxu0 %v1957
        %2172 = vmatpush.bf16.msra.mxu0 %v1953
        %2173 = vmatpush.bf16.msra.mxu0 %v1949
        %2174 = vmatpush.bf16.msra.mxu0 %v1945
        %2175 = vmatpush.bf16.msra.mxu0 %v1941
        %2176 = vmatpush.bf16.msra.mxu0 %v1937
        %2177 = vmatpush.bf16.msra.mxu0 %v1933
        %2178 = vmatmul.bf16.gmra.mxu0 %v522
        %v2179 = vpop.f32.mrf.mxu0
        %v2180 = vadd.f32 %v2167, %v2179
        %v2181 = vpop.f32.mrf.mxu0
        %2182 = vdwg.mxu0
        %2183 = vmatpush.bf16.msra.mxu0 %v1993
        %2184 = vmatpush.bf16.msra.mxu0 %v1989
        %2185 = vmatpush.bf16.msra.mxu0 %v1985
        %2186 = vmatpush.bf16.msra.mxu0 %v1981
        %2187 = vmatpush.bf16.msra.mxu0 %v1977
        %2188 = vmatpush.bf16.msra.mxu0 %v1973
        %2189 = vmatpush.bf16.msra.mxu0 %v1969
        %2190 = vmatpush.bf16.msra.mxu0 %v1965
        %2191 = vmatmul.bf16.gmra.mxu0 %v523
        %v2192 = vpop.f32.mrf.mxu0
        %v2193 = vadd.f32 %v2180, %v2192
        %v2194 = vpop.f32.mrf.mxu0
        %2195 = vdwg.mxu0
        %2196 = vmatpush.bf16.msra.mxu0 %v2025
        %2197 = vmatpush.bf16.msra.mxu0 %v2021
        %2198 = vmatpush.bf16.msra.mxu0 %v2017
        %2199 = vmatpush.bf16.msra.mxu0 %v2013
        %2200 = vmatpush.bf16.msra.mxu0 %v2009
        %2201 = vmatpush.bf16.msra.mxu0 %v2005
        %2202 = vmatpush.bf16.msra.mxu0 %v2001
        %2203 = vmatpush.bf16.msra.mxu0 %v1997
        %2204 = vmatmul.bf16.gmra.mxu0 %v524
        %v2205 = vpop.f32.mrf.mxu0
        %v2206 = vadd.f32 %v2193, %v2205
        %v2207 = vpop.f32.mrf.mxu0
        %2208 = vdwg.mxu0
        %2209 = vmatpush.bf16.msra.mxu0 %v1930
        %2210 = vmatpush.bf16.msra.mxu0 %v1926
        %2211 = vmatpush.bf16.msra.mxu0 %v1922
        %2212 = vmatpush.bf16.msra.mxu0 %v1918
        %2213 = vmatpush.bf16.msra.mxu0 %v1914
        %2214 = vmatpush.bf16.msra.mxu0 %v1910
        %2215 = vmatpush.bf16.msra.mxu0 %v1906
        %2216 = vmatpush.bf16.msra.mxu0 %v1902
        %2217 = vmatmul.bf16.gmra.mxu0 %v521
        %v2218 = vpop.f32.mrf.mxu0
        %v2219 = vadd.f32 0.0, %v2218
        %v2220 = vpop.f32.mrf.mxu0
        %2221 = vdwg.mxu0
        %2222 = vmatpush.bf16.msra.mxu0 %v1962
        %2223 = vmatpush.bf16.msra.mxu0 %v1958
        %2224 = vmatpush.bf16.msra.mxu0 %v1954
        %2225 = vmatpush.bf16.msra.mxu0 %v1950
        %2226 = vmatpush.bf16.msra.mxu0 %v1946
        %2227 = vmatpush.bf16.msra.mxu0 %v1942
        %2228 = vmatpush.bf16.msra.mxu0 %v1938
        %2229 = vmatpush.bf16.msra.mxu0 %v1934
        %2230 = vmatmul.bf16.gmra.mxu0 %v522
        %v2231 = vpop.f32.mrf.mxu0
        %v2232 = vadd.f32 %v2219, %v2231
        %v2233 = vpop.f32.mrf.mxu0
        %2234 = vdwg.mxu0
        %2235 = vmatpush.bf16.msra.mxu0 %v1994
        %2236 = vmatpush.bf16.msra.mxu0 %v1990
        %2237 = vmatpush.bf16.msra.mxu0 %v1986
        %2238 = vmatpush.bf16.msra.mxu0 %v1982
        %2239 = vmatpush.bf16.msra.mxu0 %v1978
        %2240 = vmatpush.bf16.msra.mxu0 %v1974
        %2241 = vmatpush.bf16.msra.mxu0 %v1970
        %2242 = vmatpush.bf16.msra.mxu0 %v1966
        %2243 = vmatmul.bf16.gmra.mxu0 %v523
        %v2244 = vpop.f32.mrf.mxu0
        %v2245 = vadd.f32 %v2232, %v2244
        %v2246 = vpop.f32.mrf.mxu0
        %2247 = vdwg.mxu0
        %2248 = vmatpush.bf16.msra.mxu0 %v2026
        %2249 = vmatpush.bf16.msra.mxu0 %v2022
        %2250 = vmatpush.bf16.msra.mxu0 %v2018
        %2251 = vmatpush.bf16.msra.mxu0 %v2014
        %2252 = vmatpush.bf16.msra.mxu0 %v2010
        %2253 = vmatpush.bf16.msra.mxu0 %v2006
        %2254 = vmatpush.bf16.msra.mxu0 %v2002
        %2255 = vmatpush.bf16.msra.mxu0 %v1998
        %2256 = vmatmul.bf16.gmra.mxu0 %v524
        %v2257 = vpop.f32.mrf.mxu0
        %v2258 = vadd.f32 %v2245, %v2257
        %v2259 = vpop.f32.mrf.mxu0
        %2260 = vdwg.mxu0
        %2261 = vmatpush.bf16.msra.mxu0 %v1931
        %2262 = vmatpush.bf16.msra.mxu0 %v1927
        %2263 = vmatpush.bf16.msra.mxu0 %v1923
        %2264 = vmatpush.bf16.msra.mxu0 %v1919
        %2265 = vmatpush.bf16.msra.mxu0 %v1915
        %2266 = vmatpush.bf16.msra.mxu0 %v1911
        %2267 = vmatpush.bf16.msra.mxu0 %v1907
        %2268 = vmatpush.bf16.msra.mxu0 %v1903
        %2269 = vmatmul.bf16.gmra.mxu0 %v521
        %v2270 = vpop.f32.mrf.mxu0
        %v2271 = vadd.f32 0.0, %v2270
        %v2272 = vpop.f32.mrf.mxu0
        %2273 = vdwg.mxu0
        %2274 = vmatpush.bf16.msra.mxu0 %v1963
        %2275 = vmatpush.bf16.msra.mxu0 %v1959
        %2276 = vmatpush.bf16.msra.mxu0 %v1955
        %2277 = vmatpush.bf16.msra.mxu0 %v1951
        %2278 = vmatpush.bf16.msra.mxu0 %v1947
        %2279 = vmatpush.bf16.msra.mxu0 %v1943
        %2280 = vmatpush.bf16.msra.mxu0 %v1939
        %2281 = vmatpush.bf16.msra.mxu0 %v1935
        %2282 = vmatmul.bf16.gmra.mxu0 %v522
        %v2283 = vpop.f32.mrf.mxu0
        %v2284 = vadd.f32 %v2271, %v2283
        %v2285 = vpop.f32.mrf.mxu0
        %2286 = vdwg.mxu0
        %2287 = vmatpush.bf16.msra.mxu0 %v1995
        %2288 = vmatpush.bf16.msra.mxu0 %v1991
        %2289 = vmatpush.bf16.msra.mxu0 %v1987
        %2290 = vmatpush.bf16.msra.mxu0 %v1983
        %2291 = vmatpush.bf16.msra.mxu0 %v1979
        %2292 = vmatpush.bf16.msra.mxu0 %v1975
        %2293 = vmatpush.bf16.msra.mxu0 %v1971
        %2294 = vmatpush.bf16.msra.mxu0 %v1967
        %2295 = vmatmul.bf16.gmra.mxu0 %v523
        %v2296 = vpop.f32.mrf.mxu0
        %v2297 = vadd.f32 %v2284, %v2296
        %v2298 = vpop.f32.mrf.mxu0
        %2299 = vdwg.mxu0
        %2300 = vmatpush.bf16.msra.mxu0 %v2027
        %2301 = vmatpush.bf16.msra.mxu0 %v2023
        %2302 = vmatpush.bf16.msra.mxu0 %v2019
        %2303 = vmatpush.bf16.msra.mxu0 %v2015
        %2304 = vmatpush.bf16.msra.mxu0 %v2011
        %2305 = vmatpush.bf16.msra.mxu0 %v2007
        %2306 = vmatpush.bf16.msra.mxu0 %v2003
        %2307 = vmatpush.bf16.msra.mxu0 %v1999
        %2308 = vmatmul.bf16.gmra.mxu0 %v524
        %v2309 = vpop.f32.mrf.mxu0
        %v2310 = vadd.f32 %v2297, %v2309
        %v2311 = vpop.f32.mrf.mxu0
        %2312 = vdwg.mxu0
        %2313 = vmatpush.bf16.msra.mxu0 %v1932
        %2314 = vmatpush.bf16.msra.mxu0 %v1928
        %2315 = vmatpush.bf16.msra.mxu0 %v1924
        %2316 = vmatpush.bf16.msra.mxu0 %v1920
        %2317 = vmatpush.bf16.msra.mxu0 %v1916
        %2318 = vmatpush.bf16.msra.mxu0 %v1912
        %2319 = vmatpush.bf16.msra.mxu0 %v1908
        %2320 = vmatpush.bf16.msra.mxu0 %v1904
        %2321 = vmatmul.bf16.gmra.mxu0 %v521
        %v2322 = vpop.f32.mrf.mxu0
        %v2323 = vadd.f32 0.0, %v2322
        %v2324 = vpop.f32.mrf.mxu0
        %2325 = vdwg.mxu0
        %2326 = vmatpush.bf16.msra.mxu0 %v1964
        %2327 = vmatpush.bf16.msra.mxu0 %v1960
        %2328 = vmatpush.bf16.msra.mxu0 %v1956
        %2329 = vmatpush.bf16.msra.mxu0 %v1952
        %2330 = vmatpush.bf16.msra.mxu0 %v1948
        %2331 = vmatpush.bf16.msra.mxu0 %v1944
        %2332 = vmatpush.bf16.msra.mxu0 %v1940
        %2333 = vmatpush.bf16.msra.mxu0 %v1936
        %2334 = vmatmul.bf16.gmra.mxu0 %v522
        %v2335 = vpop.f32.mrf.mxu0
        %v2336 = vadd.f32 %v2323, %v2335
        %v2337 = vpop.f32.mrf.mxu0
        %2338 = vdwg.mxu0
        %2339 = vmatpush.bf16.msra.mxu0 %v1996
        %2340 = vmatpush.bf16.msra.mxu0 %v1992
        %2341 = vmatpush.bf16.msra.mxu0 %v1988
        %2342 = vmatpush.bf16.msra.mxu0 %v1984
        %2343 = vmatpush.bf16.msra.mxu0 %v1980
        %2344 = vmatpush.bf16.msra.mxu0 %v1976
        %2345 = vmatpush.bf16.msra.mxu0 %v1972
        %2346 = vmatpush.bf16.msra.mxu0 %v1968
        %2347 = vmatmul.bf16.gmra.mxu0 %v523
        %v2348 = vpop.f32.mrf.mxu0
        %v2349 = vadd.f32 %v2336, %v2348
        %v2350 = vpop.f32.mrf.mxu0
        %2351 = vdwg.mxu0
        %2352 = vmatpush.bf16.msra.mxu0 %v2028
        %2353 = vmatpush.bf16.msra.mxu0 %v2024
        %2354 = vmatpush.bf16.msra.mxu0 %v2020
        %2355 = vmatpush.bf16.msra.mxu0 %v2016
        %2356 = vmatpush.bf16.msra.mxu0 %v2012
        %2357 = vmatpush.bf16.msra.mxu0 %v2008
        %2358 = vmatpush.bf16.msra.mxu0 %v2004
        %2359 = vmatpush.bf16.msra.mxu0 %v2000
        %2360 = vmatmul.bf16.gmra.mxu0 %v524
        %v2361 = vpop.f32.mrf.mxu0
        %v2362 = vadd.f32 %v2349, %v2361
        %v2363 = vpop.f32.mrf.mxu0
        %2364 = vdwg.mxu0
        %v2365 = vadd.f32 %v1385, %v2206
        %v2366 = vadd.f32 %v1386, %v2258
        %v2367 = vadd.f32 %v1387, %v2310
        %v2368 = vadd.f32 %v1388, %v2362
        %2369 = vst [vmem:[#allocation3] sm:$0xff] %v2365
        %2370 = vst [vmem:[#allocation3 + $0x8] sm:$0xff] %v2366
        %2371 = vst [vmem:[#allocation3 + $0x10] sm:$0xff] %v2367
        %2372 = vst [vmem:[#allocation3 + $0x18] sm:$0xff] %v2368
        %p2373 = scmp.eq.s32.totalorder %s31, 1
        // Predicated region
        $region53: #{qres_forward.1} parent=35 // pred_check
          %p2374 = pneg %p2373
        $region54: #{qres_forward.1} parent=35 // pred_check_branch
          %2376 = sbr.rel (%p2374) target = $region56
        $region55: #{qres_forward.1} parent=35 // pred_region
          %v2377 = vld [vmem:[#allocation2] sm:$0xff]
          %v2378 = vld [vmem:[#allocation2 + $0x8] sm:$0xff]
          %v2379 = vld [vmem:[#allocation2 + $0x10] sm:$0xff]
          %v2380 = vld [vmem:[#allocation2 + $0x18] sm:$0xff]
          %v2381 = vld [vmem:[#allocation3] sm:$0xff]
          %v2382 = vld [vmem:[#allocation3 + $0x8] sm:$0xff]
          %v2383 = vld [vmem:[#allocation3 + $0x10] sm:$0xff]
          %v2384 = vld [vmem:[#allocation3 + $0x18] sm:$0xff]
          %v2385 = vld [vmem:[%s308] sm:$0xf]
          %v2386 = vmul.f32 %v2377, %v2381
          %v2387 = vmul.f32 %v2378, %v2382
          %v2388 = vmul.f32 %v2379, %v2383
          %v2389 = vmul.f32 %v2380, %v2384
          %v2390 = vadd.f32 %v2386, %v2377
          %v2391 = vadd.f32 %v2387, %v2378
          %v2392 = vadd.f32 %v2388, %v2379
          %v2393 = vadd.f32 %v2389, %v2380
          %v2395 = vperm.slane %v2385, 0
          %v2396 = vperm.slane %v2385, 1
          %v2397 = vperm.slane %v2385, 2
          %v2398 = vperm.slane %v2385, 3
          %v2403 = vadd.f32 %v2390, %v2395
          %v2404 = vadd.f32 %v2391, %v2396
          %v2405 = vadd.f32 %v2392, %v2397
          %v2406 = vadd.f32 %v2393, %v2398
          %2407 = vst [vmem:[%s352] sm:$0xff] %v2403
          %2408 = vst [vmem:[%s352 + $0x8] sm:$0xff] %v2404
          %2409 = vst [vmem:[%s352 + $0x10] sm:$0xff] %v2405
          %2410 = vst [vmem:[%s352 + $0x18] sm:$0xff] %v2406
        $region56: #{qres_forward.1} parent=35 // pred_fallthru
          _
        %s2411 = sand.u32 %s163, 1
        %s2412 = scalar_lea.sflag [#allocation6], %s2411
        %s2413 = sand.u32 %s163, 1
        %s2414 = smul.addr %s2413, 32
        %s2415 = scalar_lea.vmem [#allocation10], %s2414
        // Predicated region
        $region57: #{qres_forward.1} parent=35 // pred_check
          %p2416 = pneg %p173
        $region58: #{qres_forward.1} parent=35 // pred_check_branch
          %2418 = sbr.rel (%p2416) target = $region60
        $region59: #{qres_forward.1} parent=35 // pred_region
          %s2419 = smul.u32 4, %s30
          %2421 = vsyncadd %s2412, 0
          %s2422 = smul.addr %s29, 8
          %s2423 = sadd.s32 %s2419, %s2422
          %s2424 = smul.addr %s2423, 8
          %s2425 = scalar_lea.hbm %s4, %s2424
          %s2427 = sshll.u32 %s2415, 4
          %s2428 = int_to_ptr.vmem [resolvable:$true] %s2427
          %s2429 = sshll.u32 %s2425, 4
          %s2430 = int_to_ptr.hbm [resolvable:$true] %s2429
          %2432 = dma.vmem_to_hbm [thread:$0]  %s2428, 512, %s2430, %s2412
        $region60: #{qres_forward.1} parent=35 // pred_fallthru
          _
      $region36: #{qres_forward.1} parent=5 // pred_fallthru
        _
      %p2433 = scmp.le.s32.totalorder 2, %s19
      // Predicated region
      $region61: #{qres_forward.1} parent=5 // pred_check
        %p2434 = pneg %p2433
      $region62: #{qres_forward.1} parent=5 // pred_check_branch
        %2436 = sbr.rel (%p2434) target = $region64
      $region63: #{qres_forward.1} parent=5 // pred_region
        %s2437 = ssub.s32 %s19, 2
        // Predicated region
        $region65: #{qres_forward.1} parent=63 // pred_check
          %p2438 = pneg %p179
        $region66: #{qres_forward.1} parent=63 // pred_check_branch
          %2440 = sbr.rel (%p2438) target = $region68
        $region67: #{qres_forward.1} parent=63 // pred_region
          %s2441 = sand.u32 %s164, 1
          %s2442 = scalar_lea.sflag [#allocation6], %s2441
          %s2443 = sand.u32 %s164, 1
          %s2444 = smul.addr %s2443, 32
          %s2445 = scalar_lea.vmem [#allocation10], %s2444
          %2447 = dma.done %s2442, 512
        $region68: #{qres_forward.1} parent=63 // pred_fallthru
          _
      $region64: #{qres_forward.1} parent=5 // pred_fallthru
        _
    $region6: #{qres_forward.1} parent=1 // loop_footer
      %s23 = sadd.s32 1, %s19
    $region7: #{qres_forward.1} parent=1 // loop_footer_branch
      %18 = sbr.rel target = $region3
    $region8: #{qres_forward.1} parent=1 // loop_exit
      _
    %2448 = vsyncpa [#allocation5], 1
    %s2449 = scalar_lea.sflag [#allocation5], 1
    %2450 = vsyncpa %s2449, 1
    %2451 = vsyncpa [#allocation8], 1
    %s2452 = scalar_lea.sflag [#allocation8], 1
    %2453 = vsyncpa %s2452, 1
    %2454 = vsyncpa [#allocation6], 1
    %s2455 = scalar_lea.sflag [#allocation6], 1
    %2456 = vsyncpa %s2455, 1

</llo_original>
